<compile_context>
chip_gen: v7x
topology: tpu7x:2x2x1
jax: 0.10.0
libtpu: 0.0.40
codegen_flags: <defaults>
</compile_context>

<pallas_src>
import functools

import jax
import jax.numpy as jnp
import numpy as np
from jax.experimental import pallas as pl
from jax.experimental.pallas import tpu as pltpu

_LANES = 128
_VMEM = pl.BlockSpec(memory_space=pltpu.MemorySpace.VMEM)
_SMEM = pl.BlockSpec(memory_space=pltpu.MemorySpace.SMEM)


def _round_up(v, m):
    return -(-v // m) * m


# ---------------------------------------------------------------------------
# Fused Pallas kernel: conv1+BN+LReLU -> conv2+BN+LReLU -> conv3+bias
# ---------------------------------------------------------------------------

def _critic_fused_kernel(p1_ref, w1_ref, w2_ref, w3_ref, g12_ref, g23_ref,
                         gb1_ref, gb2_ref, b3_ref, o_ref,
                         *, m1, m2, off12, off23):
    """Whole-array VMEM blocks, except b3_ref (SMEM scalar).

    p1_ref : [Cin*k*k, M1pad] f32  im2col patches of the input image
    w1_ref : [C1, Cin*k*k]    f32  conv1 weight, (cin,kh,kw)-flattened
    w2_ref : [C2, k*k*C1]     f32  conv2 weight, (kh,kw,cin)-flattened
    w3_ref : [1,  k*k*C2]     f32  conv3 weight, (kh,kw,cin)-flattened
    g12    : [M1pad, M2pad]   f32  0/1 column selection (stride-2 subsample)
    g23    : [M2pad, M3pad]   f32  0/1 column selection
    gb*    : [C, 2]           f32  packed (gamma | beta)
    b3     : [1]              f32  conv3 bias (SMEM)
    o_ref  : [1, M3pad]       f32
    """

    def bn_lrelu(y, gb_ref, m_valid):
        # Training-mode BatchNorm2d (biased var, eps=1e-5) + LeakyReLU(0.2).
        # Masked, centered statistics over the m_valid real columns (padded
        # columns never contribute).
        inv_m = 1.0 / float(m_valid)
        lane = jax.lax.broadcasted_iota(jnp.int32, y.shape, 1)
        valid = lane < m_valid
        mean = jnp.sum(jnp.where(valid, y, 0.0), axis=1, keepdims=True) * inv_m
        d = jnp.where(valid, y - mean, 0.0)
        var = jnp.sum(d * d, axis=1, keepdims=True) * inv_m
        gamma = gb_ref[:, 0:1]
        beta = gb_ref[:, 1:2]
        scale = gamma * jax.lax.rsqrt(var + 1e-5)
        shift = beta - mean * scale
        z = y * scale + shift
        return jnp.maximum(z, 0.2 * z)                  # LeakyReLU(0.2)

    def tap_stack(a, offs):
        # In-VMEM im2col: one lane-roll (XLU) per conv tap, stacked on the
        # sublane axis -> [k*k*C, Mpad].  Column j of piece t holds a[:, j+off]
        # (wraparound never reaches a column selected by g12/g23).
        mpad = a.shape[-1]
        pieces = [a if off == 0 else pltpu.roll(a, mpad - off, axis=1)
                  for off in offs]
        return jnp.concatenate(pieces, axis=0)

    # ---- block 1: conv -> BN -> LeakyReLU --------------------------------
    y1 = jnp.dot(w1_ref[...], p1_ref[...], preferred_element_type=jnp.float32)
    a1 = bn_lrelu(y1, gb1_ref, m1)                      # [C1, M1pad]

    # ---- block 2: conv (in-kernel im2col) -> BN -> LeakyReLU -------------
    r1 = tap_stack(a1, off12)                           # [k*k*C1, M1pad]
    y2_all = jnp.dot(w2_ref[...], r1, preferred_element_type=jnp.float32)
    y2 = jnp.dot(y2_all, g12_ref[...], preferred_element_type=jnp.float32)
    a2 = bn_lrelu(y2, gb2_ref, m2)                      # [C2, M2pad]

    # ---- block 3: final conv + bias ---------------------------------------
    r2 = tap_stack(a2, off23)                           # [k*k*C2, M2pad]
    y3_all = jnp.dot(w3_ref[...], r2, preferred_element_type=jnp.float32)
    y3 = jnp.dot(y3_all, g23_ref[...], preferred_element_type=jnp.float32)
    o_ref[...] = y3 + b3_ref[0]


# ---------------------------------------------------------------------------
# Thin JAX glue (input-side only) + constant index machinery
# ---------------------------------------------------------------------------

def _im2col_cnhw(x, k, s):
    """x: [C, N, H, W] -> (patches [C*k*k, N*OH*OW], OH, OW).

    Row order (c, kh, kw) matches PyTorch's weight.reshape(Cout, Cin*k*k);
    column order is row-major over (n, oh, ow).
    """
    c, n, h, w = x.shape
    oh = (h - k) // s + 1
    ow = (w - k) // s + 1
    pats = jnp.stack(
        [x[:, :, i:i + s * oh:s, j:j + s * ow:s]
         for i in range(k) for j in range(k)],
        axis=1)                                          # [C, k*k, N, OH, OW]
    return pats.reshape(c * k * k, n * oh * ow), oh, ow


def _pad_cols(x, width):
    return jnp.pad(x, ((0, 0), (0, width - x.shape[-1])))


def _select_matrix(n, oh_in, ow_in, oh_out, ow_out, s, m_in_pad, m_out_pad):
    """0/1 matrix picking, for every output column (n, oh, ow), the flattened
    input column of its top-left (kh=kw=0) conv tap.  Padded output columns
    are all-zero so downstream values there are exactly 0."""
    g = np.zeros((m_in_pad, m_out_pad), np.float32)
    for b in range(n):
        for oh in range(oh_out):
            for ow in range(ow_out):
                m_out = (b * oh_out + oh) * ow_out + ow
                base = (b * oh_in + s * oh) * ow_in + s * ow
                g[base, m_out] = 1.0
    return jnp.asarray(g)


def _tap_offsets(ow_in, k):
    """Flattened-column offset of tap (kh, kw) relative to the (0, 0) tap."""
    return tuple(kh * ow_in + kw for kh in range(k) for kw in range(k))


def critic_forward(image, params, k=4, s=2):
    """image: [N, im_chan, H, W] f32 -> [N, OH3*OW3] (== [N, 1] for 28x28)."""
    n = image.shape[0]

    # Layer-1 im2col on the network input (everything after this stays inside
    # the single fused kernel).
    x = jnp.transpose(image, (1, 0, 2, 3))               # [C, N, H, W]
    p1, oh1, ow1 = _im2col_cnhw(x, k, s)
    m1 = p1.shape[1]
    m1pad = _round_up(m1, _LANES)
    p1 = _pad_cols(p1, m1pad)

    oh2, ow2 = (oh1 - k) // s + 1, (ow1 - k) // s + 1
    m2 = n * oh2 * ow2
    m2pad = _round_up(m2, _LANES)

    oh3, ow3 = (oh2 - k) // s + 1, (ow2 - k) // s + 1
    m3 = n * oh3 * ow3
    m3pad = _round_up(m3, _LANES)

    g12 = _select_matrix(n, oh1, ow1, oh2, ow2, s, m1pad, m2pad)
    g23 = _select_matrix(n, oh2, ow2, oh3, ow3, s, m2pad, m3pad)

    kernel = functools.partial(
        _critic_fused_kernel, m1=m1, m2=m2,
        off12=_tap_offsets(ow1, k), off23=_tap_offsets(ow2, k))

    out = pl.pallas_call(
        kernel,
        out_shape=jax.ShapeDtypeStruct((1, m3pad), jnp.float32),
        in_specs=[_VMEM] * 8 + [_SMEM],
        out_specs=_VMEM,
        compiler_params=pltpu.CompilerParams(vmem_limit_bytes=32 * 1024 * 1024),
    )(p1, params["w1"], params["w2"], params["w3"], g12, g23,
      params["gb1"], params["gb2"], params["b3"])

    # critic_pred.reshape(len(critic_pred), -1)
    return out[0, :m3].reshape(n, oh3 * ow3)


# ---------------------------------------------------------------------------
# Deterministic parameter construction (synthetic weights, PyTorch shapes)
# ---------------------------------------------------------------------------

def make_params(key, im_chan, hidden_dim, k=4):
    def conv_w(key, cout, cin, tap_major):
        fan_in = cin * k * k
        w = jax.random.uniform(key, (cout, cin, k, k), jnp.float32,
                               minval=-1.0, maxval=1.0) / np.sqrt(fan_in)
        if tap_major:                          # flatten as (kh, kw, cin)
            w = jnp.transpose(w, (0, 2, 3, 1))
        return w.reshape(cout, fan_in)

    def gamma_beta(c):
        return jnp.concatenate([jnp.ones((c, 1), jnp.float32),
                                jnp.zeros((c, 1), jnp.float32)], axis=1)

    ks = jax.random.split(key, 4)
    h, h2 = hidden_dim, hidden_dim * 2
    # NOTE: conv biases of blocks 1/2 are intentionally omitted — a constant
    # per-channel shift before training-mode BatchNorm is exactly cancelled by
    # the mean subtraction, so it cannot change the forward output.
    return {
        "w1": conv_w(ks[0], h, im_chan, tap_major=False),
        "gb1": gamma_beta(h),
        "w2": conv_w(ks[1], h2, h, tap_major=True),
        "gb2": gamma_beta(h2),
        "w3": conv_w(ks[2], 1, h2, tap_major=True),
        "b3": (jax.random.uniform(ks[3], (1,), jnp.float32,
                                  minval=-1.0, maxval=1.0)
               / np.sqrt(h2 * k * k)),
    }


if __name__ == "__main__":
    # Small shapes consistent with the module: MNIST-like 28x28, 1 channel.
    N, IM_CHAN, HIDDEN, HW = 2, 1, 16, 28

    key = jax.random.PRNGKey(0)
    k_img, k_par = jax.random.split(key)
    image = jax.random.normal(k_img, (N, IM_CHAN, HW, HW), dtype=jnp.float32)
    params = make_params(k_par, IM_CHAN, HIDDEN)

    out = jax.jit(critic_forward)(image, params)
    out = jax.block_until_ready(out)
    assert out.shape == (N, 1), out.shape
    print("KERNEL_OK")
</pallas_src>

<mosaic_0001>
module attributes {stable_mosaic.version = 11 : i64} {
  func.func @_critic_fused_kernel(%arg0: memref<16x384xf32, #tpu.memory_space<vmem>>, %arg1: memref<16x16xf32, #tpu.memory_space<vmem>>, %arg2: memref<32x256xf32, #tpu.memory_space<vmem>>, %arg3: memref<1x512xf32, #tpu.memory_space<vmem>>, %arg4: memref<384x128xf32, #tpu.memory_space<vmem>>, %arg5: memref<128x128xf32, #tpu.memory_space<vmem>>, %arg6: memref<16x2xf32, #tpu.memory_space<vmem>>, %arg7: memref<32x2xf32, #tpu.memory_space<vmem>>, %arg8: memref<1xf32, #tpu.memory_space<smem>>, %arg9: memref<1x128xf32, #tpu.memory_space<vmem>>) attributes {dimension_semantics = [], scalar_prefetch = 0 : i64, scratch_operands = 0 : i64, tpu.core_type = #tpu.core_type<tc>} {
    %c0 = arith.constant 0 : index
    %c0_0 = arith.constant 0 : index
    %0 = vector.load %arg1[%c0, %c0_0] : memref<16x16xf32, #tpu.memory_space<vmem>>, vector<16x16xf32>
    %c0_1 = arith.constant 0 : index
    %c0_2 = arith.constant 0 : index
    %1 = vector.load %arg0[%c0_1, %c0_2] : memref<16x384xf32, #tpu.memory_space<vmem>>, vector<16x384xf32>
    %cst = arith.constant dense<0.000000e+00> : vector<16x384xf32>
    %2 = tpu.matmul %0, %1, %cst {dimension_numbers = #tpu.dot_dimension_numbers<[1], [0], [0], [1], [0, 0, 1, 1], [], []>} : vector<16x16xf32>, vector<16x384xf32>, vector<16x384xf32> -> vector<16x384xf32>
    %3 = tpu.iota {dimensions = array<i32: 1>} : vector<16x384xi32>
    %c338_i32 = arith.constant 338 : i32
    %4 = vector.broadcast %c338_i32 : i32 to vector<16x384xi32>
    %5 = arith.cmpi slt, %3, %4 : vector<16x384xi32>
    %cst_3 = arith.constant 0.000000e+00 : f32
    %6 = vector.broadcast %cst_3 : f32 to vector<16x384xf32>
    %7 = arith.select %5, %2, %6 : vector<16x384xi1>, vector<16x384xf32>
    %cst_4 = arith.constant dense<0.000000e+00> : vector<16xf32>
    %8 = vector.multi_reduction <add>, %7, %cst_4 [1] : vector<16x384xf32> to vector<16xf32>
    %9 = vector.shape_cast %8 : vector<16xf32> to vector<16x1xf32>
    %cst_5 = arith.constant 2.958580e-03 : f32
    %10 = vector.broadcast %cst_5 : f32 to vector<16x1xf32>
    %11 = arith.mulf %9, %10 : vector<16x1xf32>
    %12 = vector.broadcast %11 : vector<16x1xf32> to vector<16x384xf32>
    %13 = arith.subf %2, %12 : vector<16x384xf32>
    %cst_6 = arith.constant 0.000000e+00 : f32
    %14 = vector.broadcast %cst_6 : f32 to vector<16x384xf32>
    %15 = arith.select %5, %13, %14 : vector<16x384xi1>, vector<16x384xf32>
    %16 = arith.mulf %15, %15 : vector<16x384xf32>
    %cst_7 = arith.constant dense<0.000000e+00> : vector<16xf32>
    %17 = vector.multi_reduction <add>, %16, %cst_7 [1] : vector<16x384xf32> to vector<16xf32>
    %18 = vector.shape_cast %17 : vector<16xf32> to vector<16x1xf32>
    %cst_8 = arith.constant 2.958580e-03 : f32
    %19 = vector.broadcast %cst_8 : f32 to vector<16x1xf32>
    %20 = arith.mulf %18, %19 : vector<16x1xf32>
    %c0_9 = arith.constant 0 : index
    %c0_10 = arith.constant 0 : index
    %21 = vector.load %arg6[%c0_9, %c0_10] : memref<16x2xf32, #tpu.memory_space<vmem>>, vector<16x1xf32>
    %c0_11 = arith.constant 0 : index
    %c1 = arith.constant 1 : index
    %22 = vector.load %arg6[%c0_11, %c1] : memref<16x2xf32, #tpu.memory_space<vmem>>, vector<16x1xf32>
    %cst_12 = arith.constant 9.99999974E-6 : f32
    %23 = vector.broadcast %cst_12 : f32 to vector<16x1xf32>
    %24 = arith.addf %20, %23 : vector<16x1xf32>
    %25 = math.rsqrt %24 : vector<16x1xf32>
    %26 = arith.mulf %21, %25 : vector<16x1xf32>
    %27 = arith.mulf %11, %26 : vector<16x1xf32>
    %28 = arith.subf %22, %27 : vector<16x1xf32>
    %29 = vector.broadcast %26 : vector<16x1xf32> to vector<16x384xf32>
    %30 = arith.mulf %2, %29 : vector<16x384xf32>
    %31 = vector.broadcast %28 : vector<16x1xf32> to vector<16x384xf32>
    %32 = arith.addf %30, %31 : vector<16x384xf32>
    %cst_13 = arith.constant 2.000000e-01 : f32
    %33 = vector.broadcast %cst_13 : f32 to vector<16x384xf32>
    %34 = arith.mulf %33, %32 : vector<16x384xf32>
    %35 = arith.maximumf %32, %34 : vector<16x384xf32>
    %c383_i32 = arith.constant 383 : i32
    %36 = tpu.dynamic_rotate %35 by %c383_i32 dim 1 : vector<16x384xf32>, i32 -> vector<16x384xf32>
    %c382_i32 = arith.constant 382 : i32
    %37 = tpu.dynamic_rotate %35 by %c382_i32 dim 1 : vector<16x384xf32>, i32 -> vector<16x384xf32>
    %c381_i32 = arith.constant 381 : i32
    %38 = tpu.dynamic_rotate %35 by %c381_i32 dim 1 : vector<16x384xf32>, i32 -> vector<16x384xf32>
    %c371_i32 = arith.constant 371 : i32
    %39 = tpu.dynamic_rotate %35 by %c371_i32 dim 1 : vector<16x384xf32>, i32 -> vector<16x384xf32>
    %c370_i32 = arith.constant 370 : i32
    %40 = tpu.dynamic_rotate %35 by %c370_i32 dim 1 : vector<16x384xf32>, i32 -> vector<16x384xf32>
    %c369_i32 = arith.constant 369 : i32
    %41 = tpu.dynamic_rotate %35 by %c369_i32 dim 1 : vector<16x384xf32>, i32 -> vector<16x384xf32>
    %c368_i32 = arith.constant 368 : i32
    %42 = tpu.dynamic_rotate %35 by %c368_i32 dim 1 : vector<16x384xf32>, i32 -> vector<16x384xf32>
    %c358_i32 = arith.constant 358 : i32
    %43 = tpu.dynamic_rotate %35 by %c358_i32 dim 1 : vector<16x384xf32>, i32 -> vector<16x384xf32>
    %c357_i32 = arith.constant 357 : i32
    %44 = tpu.dynamic_rotate %35 by %c357_i32 dim 1 : vector<16x384xf32>, i32 -> vector<16x384xf32>
    %c356_i32 = arith.constant 356 : i32
    %45 = tpu.dynamic_rotate %35 by %c356_i32 dim 1 : vector<16x384xf32>, i32 -> vector<16x384xf32>
    %c355_i32 = arith.constant 355 : i32
    %46 = tpu.dynamic_rotate %35 by %c355_i32 dim 1 : vector<16x384xf32>, i32 -> vector<16x384xf32>
    %c345_i32 = arith.constant 345 : i32
    %47 = tpu.dynamic_rotate %35 by %c345_i32 dim 1 : vector<16x384xf32>, i32 -> vector<16x384xf32>
    %c344_i32 = arith.constant 344 : i32
    %48 = tpu.dynamic_rotate %35 by %c344_i32 dim 1 : vector<16x384xf32>, i32 -> vector<16x384xf32>
    %c343_i32 = arith.constant 343 : i32
    %49 = tpu.dynamic_rotate %35 by %c343_i32 dim 1 : vector<16x384xf32>, i32 -> vector<16x384xf32>
    %c342_i32 = arith.constant 342 : i32
    %50 = tpu.dynamic_rotate %35 by %c342_i32 dim 1 : vector<16x384xf32>, i32 -> vector<16x384xf32>
    %51 = tpu.concatenate %35, %36, %37, %38, %39, %40, %41, %42, %43, %44, %45, %46, %47, %48, %49, %50 in 0 : vector<16x384xf32>, vector<16x384xf32>, vector<16x384xf32>, vector<16x384xf32>, vector<16x384xf32>, vector<16x384xf32>, vector<16x384xf32>, vector<16x384xf32>, vector<16x384xf32>, vector<16x384xf32>, vector<16x384xf32>, vector<16x384xf32>, vector<16x384xf32>, vector<16x384xf32>, vector<16x384xf32>, vector<16x384xf32> -> vector<256x384xf32>
    %c0_14 = arith.constant 0 : index
    %c0_15 = arith.constant 0 : index
    %52 = vector.load %arg2[%c0_14, %c0_15] : memref<32x256xf32, #tpu.memory_space<vmem>>, vector<32x256xf32>
    %cst_16 = arith.constant dense<0.000000e+00> : vector<32x384xf32>
    %53 = tpu.matmul %52, %51, %cst_16 {dimension_numbers = #tpu.dot_dimension_numbers<[1], [0], [0], [1], [0, 0, 1, 1], [], []>} : vector<32x256xf32>, vector<256x384xf32>, vector<32x384xf32> -> vector<32x384xf32>
    %c0_17 = arith.constant 0 : index
    %c0_18 = arith.constant 0 : index
    %54 = vector.load %arg4[%c0_17, %c0_18] : memref<384x128xf32, #tpu.memory_space<vmem>>, vector<384x128xf32>
    %cst_19 = arith.constant dense<0.000000e+00> : vector<32x128xf32>
    %55 = tpu.matmul %53, %54, %cst_19 {dimension_numbers = #tpu.dot_dimension_numbers<[1], [0], [0], [1], [0, 0, 1, 1], [], []>} : vector<32x384xf32>, vector<384x128xf32>, vector<32x128xf32> -> vector<32x128xf32>
    %56 = tpu.iota {dimensions = array<i32: 1>} : vector<32x128xi32>
    %c50_i32 = arith.constant 50 : i32
    %57 = vector.broadcast %c50_i32 : i32 to vector<32x128xi32>
    %58 = arith.cmpi slt, %56, %57 : vector<32x128xi32>
    %cst_20 = arith.constant 0.000000e+00 : f32
    %59 = vector.broadcast %cst_20 : f32 to vector<32x128xf32>
    %60 = arith.select %58, %55, %59 : vector<32x128xi1>, vector<32x128xf32>
    %cst_21 = arith.constant dense<0.000000e+00> : vector<32xf32>
    %61 = vector.multi_reduction <add>, %60, %cst_21 [1] : vector<32x128xf32> to vector<32xf32>
    %62 = vector.shape_cast %61 : vector<32xf32> to vector<32x1xf32>
    %cst_22 = arith.constant 2.000000e-02 : f32
    %63 = vector.broadcast %cst_22 : f32 to vector<32x1xf32>
    %64 = arith.mulf %62, %63 : vector<32x1xf32>
    %65 = vector.broadcast %64 : vector<32x1xf32> to vector<32x128xf32>
    %66 = arith.subf %55, %65 : vector<32x128xf32>
    %cst_23 = arith.constant 0.000000e+00 : f32
    %67 = vector.broadcast %cst_23 : f32 to vector<32x128xf32>
    %68 = arith.select %58, %66, %67 : vector<32x128xi1>, vector<32x128xf32>
    %69 = arith.mulf %68, %68 : vector<32x128xf32>
    %cst_24 = arith.constant dense<0.000000e+00> : vector<32xf32>
    %70 = vector.multi_reduction <add>, %69, %cst_24 [1] : vector<32x128xf32> to vector<32xf32>
    %71 = vector.shape_cast %70 : vector<32xf32> to vector<32x1xf32>
    %cst_25 = arith.constant 2.000000e-02 : f32
    %72 = vector.broadcast %cst_25 : f32 to vector<32x1xf32>
    %73 = arith.mulf %71, %72 : vector<32x1xf32>
    %c0_26 = arith.constant 0 : index
    %c0_27 = arith.constant 0 : index
    %74 = vector.load %arg7[%c0_26, %c0_27] : memref<32x2xf32, #tpu.memory_space<vmem>>, vector<32x1xf32>
    %c0_28 = arith.constant 0 : index
    %c1_29 = arith.constant 1 : index
    %75 = vector.load %arg7[%c0_28, %c1_29] : memref<32x2xf32, #tpu.memory_space<vmem>>, vector<32x1xf32>
    %cst_30 = arith.constant 9.99999974E-6 : f32
    %76 = vector.broadcast %cst_30 : f32 to vector<32x1xf32>
    %77 = arith.addf %73, %76 : vector<32x1xf32>
    %78 = math.rsqrt %77 : vector<32x1xf32>
    %79 = arith.mulf %74, %78 : vector<32x1xf32>
    %80 = arith.mulf %64, %79 : vector<32x1xf32>
    %81 = arith.subf %75, %80 : vector<32x1xf32>
    %82 = vector.broadcast %79 : vector<32x1xf32> to vector<32x128xf32>
    %83 = arith.mulf %55, %82 : vector<32x128xf32>
    %84 = vector.broadcast %81 : vector<32x1xf32> to vector<32x128xf32>
    %85 = arith.addf %83, %84 : vector<32x128xf32>
    %cst_31 = arith.constant 2.000000e-01 : f32
    %86 = vector.broadcast %cst_31 : f32 to vector<32x128xf32>
    %87 = arith.mulf %86, %85 : vector<32x128xf32>
    %88 = arith.maximumf %85, %87 : vector<32x128xf32>
    %c127_i32 = arith.constant 127 : i32
    %89 = tpu.dynamic_rotate %88 by %c127_i32 dim 1 : vector<32x128xf32>, i32 -> vector<32x128xf32>
    %c126_i32 = arith.constant 126 : i32
    %90 = tpu.dynamic_rotate %88 by %c126_i32 dim 1 : vector<32x128xf32>, i32 -> vector<32x128xf32>
    %c125_i32 = arith.constant 125 : i32
    %91 = tpu.dynamic_rotate %88 by %c125_i32 dim 1 : vector<32x128xf32>, i32 -> vector<32x128xf32>
    %c123_i32 = arith.constant 123 : i32
    %92 = tpu.dynamic_rotate %88 by %c123_i32 dim 1 : vector<32x128xf32>, i32 -> vector<32x128xf32>
    %c122_i32 = arith.constant 122 : i32
    %93 = tpu.dynamic_rotate %88 by %c122_i32 dim 1 : vector<32x128xf32>, i32 -> vector<32x128xf32>
    %c121_i32 = arith.constant 121 : i32
    %94 = tpu.dynamic_rotate %88 by %c121_i32 dim 1 : vector<32x128xf32>, i32 -> vector<32x128xf32>
    %c120_i32 = arith.constant 120 : i32
    %95 = tpu.dynamic_rotate %88 by %c120_i32 dim 1 : vector<32x128xf32>, i32 -> vector<32x128xf32>
    %c118_i32 = arith.constant 118 : i32
    %96 = tpu.dynamic_rotate %88 by %c118_i32 dim 1 : vector<32x128xf32>, i32 -> vector<32x128xf32>
    %c117_i32 = arith.constant 117 : i32
    %97 = tpu.dynamic_rotate %88 by %c117_i32 dim 1 : vector<32x128xf32>, i32 -> vector<32x128xf32>
    %c116_i32 = arith.constant 116 : i32
    %98 = tpu.dynamic_rotate %88 by %c116_i32 dim 1 : vector<32x128xf32>, i32 -> vector<32x128xf32>
    %c115_i32 = arith.constant 115 : i32
    %99 = tpu.dynamic_rotate %88 by %c115_i32 dim 1 : vector<32x128xf32>, i32 -> vector<32x128xf32>
    %c113_i32 = arith.constant 113 : i32
    %100 = tpu.dynamic_rotate %88 by %c113_i32 dim 1 : vector<32x128xf32>, i32 -> vector<32x128xf32>
    %c112_i32 = arith.constant 112 : i32
    %101 = tpu.dynamic_rotate %88 by %c112_i32 dim 1 : vector<32x128xf32>, i32 -> vector<32x128xf32>
    %c111_i32 = arith.constant 111 : i32
    %102 = tpu.dynamic_rotate %88 by %c111_i32 dim 1 : vector<32x128xf32>, i32 -> vector<32x128xf32>
    %c110_i32 = arith.constant 110 : i32
    %103 = tpu.dynamic_rotate %88 by %c110_i32 dim 1 : vector<32x128xf32>, i32 -> vector<32x128xf32>
    %104 = tpu.concatenate %88, %89, %90, %91, %92, %93, %94, %95, %96, %97, %98, %99, %100, %101, %102, %103 in 0 : vector<32x128xf32>, vector<32x128xf32>, vector<32x128xf32>, vector<32x128xf32>, vector<32x128xf32>, vector<32x128xf32>, vector<32x128xf32>, vector<32x128xf32>, vector<32x128xf32>, vector<32x128xf32>, vector<32x128xf32>, vector<32x128xf32>, vector<32x128xf32>, vector<32x128xf32>, vector<32x128xf32>, vector<32x128xf32> -> vector<512x128xf32>
    %c0_32 = arith.constant 0 : index
    %c0_33 = arith.constant 0 : index
    %105 = vector.load %arg3[%c0_32, %c0_33] : memref<1x512xf32, #tpu.memory_space<vmem>>, vector<1x512xf32>
    %cst_34 = arith.constant dense<0.000000e+00> : vector<1x128xf32>
    %106 = tpu.matmul %105, %104, %cst_34 {dimension_numbers = #tpu.dot_dimension_numbers<[1], [0], [0], [1], [0, 0, 1, 1], [], []>} : vector<1x512xf32>, vector<512x128xf32>, vector<1x128xf32> -> vector<1x128xf32>
    %c0_35 = arith.constant 0 : index
    %c0_36 = arith.constant 0 : index
    %107 = vector.load %arg5[%c0_35, %c0_36] : memref<128x128xf32, #tpu.memory_space<vmem>>, vector<128x128xf32>
    %cst_37 = arith.constant dense<0.000000e+00> : vector<1x128xf32>
    %108 = tpu.matmul %106, %107, %cst_37 {dimension_numbers = #tpu.dot_dimension_numbers<[1], [0], [0], [1], [0, 0, 1, 1], [], []>} : vector<1x128xf32>, vector<128x128xf32>, vector<1x128xf32> -> vector<1x128xf32>
    %c0_38 = arith.constant 0 : index
    %109 = memref.load %arg8[%c0_38] : memref<1xf32, #tpu.memory_space<smem>>
    %110 = vector.broadcast %109 : f32 to vector<1x128xf32>
    %111 = arith.addf %108, %110 : vector<1x128xf32>
    %c0_39 = arith.constant 0 : index
    %c0_40 = arith.constant 0 : index
    %112 = vector.load %arg9[%c0_39, %c0_40] : memref<1x128xf32, #tpu.memory_space<vmem>>, vector<1x128xf32>
    tpu.vector_store %arg9[%c0_39, %c0_40], %111 {strides = array<i32>} : memref<1x128xf32, #tpu.memory_space<vmem>>, vector<1x128xf32>,
    return
  }
}

</mosaic_0001>

<llo_original>
// kernel: critic_forward.1
$region0: #{critic_forward.1}
  #allocation0 [shape = 'u32[]', space=smem, size = 0x4, offset = 0x4, fixed_abs, tag = 'smem constant byte address 0x4 - core index']
  #allocation1 [shape = 'u32[144,128]{1,0:T(1,128)}', space=vmem, size = 0x12000, scoped, tag = 'internal scratch']
  #allocation2 [shape = 'f32[1]{0:T(128)S(6)}', space=smem, size = 0x200, scoped, tag = 'scoped memory for critic_forward.1']
  %s0 = inlined_call_operand.vmem [shape: f32[16,384], index: 0, kind: input, shape index: {}]
  %s1 = inlined_call_operand.vmem [shape: f32[16,16], index: 1, kind: input, shape index: {}]
  %s2 = inlined_call_operand.vmem [shape: f32[32,256], index: 2, kind: input, shape index: {}]
  %s3 = inlined_call_operand.vmem [shape: f32[1,512], index: 3, kind: input, shape index: {}]
  %s4 = inlined_call_operand.vmem [shape: f32[384,128], index: 4, kind: input, shape index: {}]
  %s5 = inlined_call_operand.vmem [shape: f32[128,128], index: 5, kind: input, shape index: {}]
  %s6 = inlined_call_operand.vmem [shape: f32[16,2], index: 6, kind: input, shape index: {}]
  %s7 = inlined_call_operand.vmem [shape: f32[32,2], index: 7, kind: input, shape index: {}]
  %s8 = inlined_call_operand.<no memory space> [shape: f32[1], index: 8, kind: input, shape index: {}]
  %s9 = inlined_call_operand.vmem [shape: f32[1,128], index: 9, kind: output, shape index: {}]
  %s10 = sld [smem:[#allocation0]]
  $region46: #{critic_forward.1} parent=0
    _
  %s12 = ssub.s32 1, %s10
  %s13 = scalar_select 0, %s12, %s10
  %14 = sst [smem:[#allocation2]] %s8
  // Predicated region
  $region2: #{critic_forward.1} parent=0 // pred_check
    _
  $region3: #{critic_forward.1} parent=0 // pred_check_branch
    %16 = sbr.rel (0) target = $region5
  $region4: #{critic_forward.1} parent=0 // pred_region
    _
  $region5: #{critic_forward.1} parent=0 // pred_fallthru
    _
  // Predicated region
  $region6: #{critic_forward.1} parent=0 // pred_check
    _
  $region7: #{critic_forward.1} parent=0 // pred_check_branch
    %18 = sbr.rel (0) target = $region9
  $region8: #{critic_forward.1} parent=0 // pred_region
    _
  $region9: #{critic_forward.1} parent=0 // pred_fallthru
    _
  // Predicated region
  $region10: #{critic_forward.1} parent=0 // pred_check
    _
  $region11: #{critic_forward.1} parent=0 // pred_check_branch
    %20 = sbr.rel (0) target = $region13
  $region12: #{critic_forward.1} parent=0 // pred_region
    _
  $region13: #{critic_forward.1} parent=0 // pred_fallthru
    _
  // Predicated region
  $region14: #{critic_forward.1} parent=0 // pred_check
    _
  $region15: #{critic_forward.1} parent=0 // pred_check_branch
    %22 = sbr.rel (0) target = $region17
  $region16: #{critic_forward.1} parent=0 // pred_region
    _
  $region17: #{critic_forward.1} parent=0 // pred_fallthru
    _
  // Predicated region
  $region18: #{critic_forward.1} parent=0 // pred_check
    _
  $region19: #{critic_forward.1} parent=0 // pred_check_branch
    %24 = sbr.rel (0) target = $region21
  $region20: #{critic_forward.1} parent=0 // pred_region
    _
  $region21: #{critic_forward.1} parent=0 // pred_fallthru
    _
  // Predicated region
  $region22: #{critic_forward.1} parent=0 // pred_check
    _
  $region23: #{critic_forward.1} parent=0 // pred_check_branch
    %26 = sbr.rel (0) target = $region25
  $region24: #{critic_forward.1} parent=0 // pred_region
    _
  $region25: #{critic_forward.1} parent=0 // pred_fallthru
    _
  // Predicated region
  $region26: #{critic_forward.1} parent=0 // pred_check
    _
  $region27: #{critic_forward.1} parent=0 // pred_check_branch
    %28 = sbr.rel (0) target = $region29
  $region28: #{critic_forward.1} parent=0 // pred_region
    _
  $region29: #{critic_forward.1} parent=0 // pred_fallthru
    _
  // Predicated region
  $region30: #{critic_forward.1} parent=0 // pred_check
    _
  $region31: #{critic_forward.1} parent=0 // pred_check_branch
    %30 = sbr.rel (0) target = $region33
  $region32: #{critic_forward.1} parent=0 // pred_region
    _
  $region33: #{critic_forward.1} parent=0 // pred_fallthru
    _
  // Predicated region
  $region34: #{critic_forward.1} parent=0 // pred_check
    _
  $region35: #{critic_forward.1} parent=0 // pred_check_branch
    %32 = sbr.rel (0) target = $region37
  $region36: #{critic_forward.1} parent=0 // pred_region
    _
  $region37: #{critic_forward.1} parent=0 // pred_fallthru
    _
  %v33 = vld [vmem:[%s1] sm:$0xff]
  %v34 = vld [vmem:[%s1 + $0x8] sm:$0xff]
  %v35 = vld [vmem:[%s0] sm:$0xff]
  %v36 = vld [vmem:[%s0 + $0x8] sm:$0xff]
  %v37 = vld [vmem:[%s0 + $0x10] sm:$0xff]
  %v38 = vld [vmem:[%s0 + $0x18] sm:$0xff]
  %v39 = vld [vmem:[%s0 + $0x20] sm:$0xff]
  %v40 = vld [vmem:[%s0 + $0x28] sm:$0xff]
  %vm41 = vcmask 130048
  %v43 = vsel %vm41, %v33, 0
  %v46 = vsel %vm41, %v34, 0
  %48 = vmatprep.subr.mxu0 %v36
  %49 = vmatpush1.msra.mxu0 %v35
  %50 = vmatprep.subr.mxu0 %v39
  %51 = vmatpush1.msra.mxu0 %v38
  %52 = vmatprep.subr.mxu0 0.0
  %53 = vmatpush1.msra.mxu0 0.0
  %54 = vmatprep.subr.mxu0 0.0
  %55 = vmatpush1.msra.mxu0 0.0
  %56 = vmatprep.subr.mxu0 0.0
  %57 = vmatpush1.msra.mxu0 0.0
  %58 = vmatprep.subr.mxu0 0.0
  %59 = vmatpush1.msra.mxu0 0.0
  %60 = vmatprep.subr.mxu0 0.0
  %61 = vmatpush1.msra.mxu0 0.0
  %62 = vmatprep.subr.mxu0 0.0
  %63 = vmatpush1.msra.mxu0 0.0
  %64 = vmatprep.subr.mxu0 0.0
  %65 = vmatpush1.msra.mxu0 0.0
  %66 = vmatprep.subr.mxu0 0.0
  %67 = vmatpush1.msra.mxu0 0.0
  %68 = vmatprep.subr.mxu0 0.0
  %69 = vmatpush1.msra.mxu0 0.0
  %70 = vmatprep.subr.mxu0 0.0
  %71 = vmatpush1.msra.mxu0 0.0
  %72 = vmatprep.subr.mxu0 0.0
  %73 = vmatpush1.msra.mxu0 0.0
  %74 = vmatprep.subr.mxu0 0.0
  %75 = vmatpush1.msra.mxu0 0.0
  %76 = vmatprep.subr.mxu0 0.0
  %77 = vmatpush1.msra.mxu0 0.0
  %78 = vmatprep.subr.mxu0 0.0
  %79 = vmatpush1.msra.mxu0 0.0
  %80 = vmatprep.subr.mxu0 0.0
  %81 = vmatpush1.msra.mxu0 0.0
  %82 = vmatprep.subr.mxu0 0.0
  %83 = vmatpush1.msra.mxu0 0.0
  %84 = vmatprep.subr.mxu0 0.0
  %85 = vmatpush1.msra.mxu0 0.0
  %86 = vmatprep.subr.mxu0 0.0
  %87 = vmatpush1.msra.mxu0 0.0
  %88 = vmatprep.subr.mxu0 0.0
  %89 = vmatpush1.msra.mxu0 0.0
  %90 = vmatprep.subr.mxu0 0.0
  %91 = vmatpush1.msra.mxu0 0.0
  %92 = vmatprep.subr.mxu0 0.0
  %93 = vmatpush1.msra.mxu0 0.0
  %94 = vmatprep.subr.mxu0 0.0
  %95 = vmatpush1.msra.mxu0 0.0
  %96 = vmatprep.subr.mxu0 0.0
  %97 = vmatpush1.msra.mxu0 0.0
  %98 = vmatprep.subr.mxu0 0.0
  %99 = vmatpush1.msra.mxu0 0.0
  %100 = vmatprep.subr.mxu0 0.0
  %101 = vmatpush1.msra.mxu0 0.0
  %102 = vmatprep.subr.mxu0 0.0
  %103 = vmatpush1.msra.mxu0 0.0
  %104 = vmatprep.subr.mxu0 0.0
  %105 = vmatpush1.msra.mxu0 0.0
  %106 = vmatprep.subr.mxu0 0.0
  %107 = vmatpush1.msra.mxu0 0.0
  %108 = vmatprep.subr.mxu0 0.0
  %109 = vmatpush1.msra.mxu0 0.0
  %110 = vmatprep.subr.mxu0 0.0
  %111 = vmatpush1.msra.mxu0 0.0
  %112 = vmatprep.mubr.f32.mxu0 0.0
  %113 = vmatmul.mubr.f32.gmra.mrb[0].mxu0 %v43
  %v114 = vpop.f32.mrb[0].mxu0
  %v115 = vadd.f32 0.0, %v114
  %v116 = vpop.f32.mrb[0].mxu0
  %v117 = vadd.f32 0.0, %v116
  %118 = vmatprep.mubr.f32.mxu0 0.0
  %119 = vmatmul.mubr.f32.gmra.mrb[0].mxu0 %v46
  %v120 = vpop.f32.mrb[0].mxu0
  %v121 = vadd.f32 0.0, %v120
  %v122 = vpop.f32.mrb[0].mxu0
  %v123 = vadd.f32 0.0, %v122
  %124 = vdwg.mxu0
  %125 = vmatprep.subr.mxu0 0.0
  %126 = vmatpush1.msra.mxu0 %v37
  %127 = vmatprep.subr.mxu0 0.0
  %128 = vmatpush1.msra.mxu0 %v40
  %129 = vmatprep.subr.mxu0 0.0
  %130 = vmatpush1.msra.mxu0 0.0
  %131 = vmatprep.subr.mxu0 0.0
  %132 = vmatpush1.msra.mxu0 0.0
  %133 = vmatprep.subr.mxu0 0.0
  %134 = vmatpush1.msra.mxu0 0.0
  %135 = vmatprep.subr.mxu0 0.0
  %136 = vmatpush1.msra.mxu0 0.0
  %137 = vmatprep.subr.mxu0 0.0
  %138 = vmatpush1.msra.mxu0 0.0
  %139 = vmatprep.subr.mxu0 0.0
  %140 = vmatpush1.msra.mxu0 0.0
  %141 = vmatprep.subr.mxu0 0.0
  %142 = vmatpush1.msra.mxu0 0.0
  %143 = vmatprep.subr.mxu0 0.0
  %144 = vmatpush1.msra.mxu0 0.0
  %145 = vmatprep.subr.mxu0 0.0
  %146 = vmatpush1.msra.mxu0 0.0
  %147 = vmatprep.subr.mxu0 0.0
  %148 = vmatpush1.msra.mxu0 0.0
  %149 = vmatprep.subr.mxu0 0.0
  %150 = vmatpush1.msra.mxu0 0.0
  %151 = vmatprep.subr.mxu0 0.0
  %152 = vmatpush1.msra.mxu0 0.0
  %153 = vmatprep.subr.mxu0 0.0
  %154 = vmatpush1.msra.mxu0 0.0
  %155 = vmatprep.subr.mxu0 0.0
  %156 = vmatpush1.msra.mxu0 0.0
  %157 = vmatprep.subr.mxu0 0.0
  %158 = vmatpush1.msra.mxu0 0.0
  %159 = vmatprep.subr.mxu0 0.0
  %160 = vmatpush1.msra.mxu0 0.0
  %161 = vmatprep.subr.mxu0 0.0
  %162 = vmatpush1.msra.mxu0 0.0
  %163 = vmatprep.subr.mxu0 0.0
  %164 = vmatpush1.msra.mxu0 0.0
  %165 = vmatprep.subr.mxu0 0.0
  %166 = vmatpush1.msra.mxu0 0.0
  %167 = vmatprep.subr.mxu0 0.0
  %168 = vmatpush1.msra.mxu0 0.0
  %169 = vmatprep.subr.mxu0 0.0
  %170 = vmatpush1.msra.mxu0 0.0
  %171 = vmatprep.subr.mxu0 0.0
  %172 = vmatpush1.msra.mxu0 0.0
  %173 = vmatprep.subr.mxu0 0.0
  %174 = vmatpush1.msra.mxu0 0.0
  %175 = vmatprep.subr.mxu0 0.0
  %176 = vmatpush1.msra.mxu0 0.0
  %177 = vmatprep.subr.mxu0 0.0
  %178 = vmatpush1.msra.mxu0 0.0
  %179 = vmatprep.subr.mxu0 0.0
  %180 = vmatpush1.msra.mxu0 0.0
  %181 = vmatprep.subr.mxu0 0.0
  %182 = vmatpush1.msra.mxu0 0.0
  %183 = vmatprep.subr.mxu0 0.0
  %184 = vmatpush1.msra.mxu0 0.0
  %185 = vmatprep.subr.mxu0 0.0
  %186 = vmatpush1.msra.mxu0 0.0
  %187 = vmatprep.subr.mxu0 0.0
  %188 = vmatpush1.msra.mxu0 0.0
  %189 = vmatprep.mubr.f32.mxu0 0.0
  %190 = vmatmul.mubr.f32.gmra.mrb[0].mxu0 %v43
  %v191 = vpop.f32.mrb[0].mxu0
  %v192 = vadd.f32 0.0, %v191
  %v193 = vpop.f32.mrb[0].mxu0
  %194 = vmatprep.mubr.f32.mxu0 0.0
  %195 = vmatmul.mubr.f32.gmra.mrb[0].mxu0 %v46
  %v196 = vpop.f32.mrb[0].mxu0
  %v197 = vadd.f32 0.0, %v196
  %v198 = vpop.f32.mrb[0].mxu0
  %199 = vdwg.mxu0
  %v200 = vlaneseq
  %v201 = vand.u32 %v200, 127
  %v202 = vadd.s32 %v201, 128
  %v203 = vadd.s32 %v201, 256
  %vm204 = vcmp.lt.s32.totalorder %v201, 338
  %vm205 = vcmp.lt.s32.totalorder %v202, 338
  %vm206 = vcmp.lt.s32.totalorder %v203, 338
  %v207 = vsel %vm204, %v115, 0.0
  %v208 = vsel %vm205, %v117, 0.0
  %v209 = vsel %vm206, %v192, 0.0
  %v210 = vsel %vm204, %v121, 0.0
  %v211 = vsel %vm205, %v123, 0.0
  %v212 = vsel %vm206, %v197, 0.0
  %v213 = vadd.f32 %v207, %v208
  %v214 = vadd.f32 %v213, %v209
  %215 = vadd.xlane.f32.xlu0 %v214
  %v216 = vpop.xlane.xlu0 %215
  %v217 = vadd.f32 %v210, %v211
  %v218 = vadd.f32 %v217, %v212
  %219 = vadd.xlane.f32.xlu0 %v218
  %v220 = vpop.xlane.xlu0 %219
  %v221 = vmul.f32 %v216, 0.00295858
  %v222 = vmul.f32 %v220, 0.00295858
  %v223 = vsub.f32 %v115, %v221
  %v224 = vsub.f32 %v117, %v221
  %v225 = vsub.f32 %v192, %v221
  %v226 = vsub.f32 %v121, %v222
  %v227 = vsub.f32 %v123, %v222
  %v228 = vsub.f32 %v197, %v222
  %v229 = vsel %vm204, %v223, 0.0
  %v230 = vsel %vm205, %v224, 0.0
  %v231 = vsel %vm206, %v225, 0.0
  %v232 = vsel %vm204, %v226, 0.0
  %v233 = vsel %vm205, %v227, 0.0
  %v234 = vsel %vm206, %v228, 0.0
  %v235 = vmul.f32 %v229, %v229
  %v236 = vmul.f32 %v230, %v230
  %v237 = vmul.f32 %v231, %v231
  %v238 = vmul.f32 %v232, %v232
  %v239 = vmul.f32 %v233, %v233
  %v240 = vmul.f32 %v234, %v234
  %v241 = vadd.f32 %v235, %v236
  %v242 = vadd.f32 %v241, %v237
  %243 = vadd.xlane.f32.xlu0 %v242
  %v244 = vpop.xlane.xlu0 %243
  %v245 = vadd.f32 %v238, %v239
  %v246 = vadd.f32 %v245, %v240
  %247 = vadd.xlane.f32.xlu0 %v246
  %v248 = vpop.xlane.xlu0 %247
  %v249 = vmul.f32 %v244, 0.00295858
  %v250 = vmul.f32 %v248, 0.00295858
  %v251 = vld [vmem:[%s6] sm:$0xff]
  %v252 = vld [vmem:[%s6 + $0x8] sm:$0xff]
  %v253 = vadd.f32 %v249, 1e-05
  %v254 = vadd.f32 %v250, 1e-05
  %v255 = vrsqrt.pop %v253
  %v256 = vrsqrt.pop %v254
  %v257 = vmul.f32 %v251, %v255
  %v258 = vmul.f32 %v252, %v256
  %v259 = vmul.f32 %v221, %v257
  %v260 = vmul.f32 %v222, %v258
  %263 = vrot.lane.b32.xlu0 %v259, 1
  %v264 = vpop.permute.xlu0 %263
  %265 = vrot.lane.b32.xlu0 %v260, 1
  %v266 = vpop.permute.xlu0 %265
  %v269 = vsub.f32 %v251, %v264
  %v270 = vsub.f32 %v252, %v266
  %272 = vset.pattern.permute.xlu0 0
  %273 = vperm.xlu0 %272, %v257
  %v274 = vpop.permute.xlu0 %273
  %277 = vset.pattern.permute.xlu0 0
  %278 = vperm.xlu0 %277, %v258
  %v279 = vpop.permute.xlu0 %278
  %v281 = vmul.f32 %v115, %v274
  %v282 = vmul.f32 %v117, %v274
  %v283 = vmul.f32 %v192, %v274
  %v284 = vmul.f32 %v121, %v279
  %v285 = vmul.f32 %v123, %v279
  %v286 = vmul.f32 %v197, %v279
  %288 = vset.pattern.permute.xlu0 1
  %289 = vperm.xlu0 %288, %v269
  %v290 = vpop.permute.xlu0 %289
  %293 = vset.pattern.permute.xlu0 1
  %294 = vperm.xlu0 %293, %v270
  %v295 = vpop.permute.xlu0 %294
  %v297 = vadd.f32 %v281, %v290
  %v298 = vadd.f32 %v282, %v290
  %v299 = vadd.f32 %v283, %v290
  %v300 = vadd.f32 %v284, %v295
  %v301 = vadd.f32 %v285, %v295
  %v302 = vadd.f32 %v286, %v295
  %v303 = vmul.f32 %v297, 0.2
  %v304 = vmul.f32 %v298, 0.2
  %v305 = vmul.f32 %v299, 0.2
  %v306 = vmul.f32 %v300, 0.2
  %v307 = vmul.f32 %v301, 0.2
  %v308 = vmul.f32 %v302, 0.2
  %v309 = vmax.f32 %v297, %v303
  %v310 = vmax.f32 %v298, %v304
  %v311 = vmax.f32 %v299, %v305
  %v312 = vmax.f32 %v300, %v306
  %v313 = vmax.f32 %v301, %v307
  %v314 = vmax.f32 %v302, %v308
  %315 = vrot.lane.b32.xlu0 %v309, 127
  %v316 = vpop.permute.xlu0 %315
  %317 = vrot.lane.b32.xlu0 %v312, 127
  %v318 = vpop.permute.xlu0 %317
  %319 = vrot.lane.b32.xlu0 %v310, 127
  %v320 = vpop.permute.xlu0 %319
  %321 = vrot.lane.b32.xlu0 %v313, 127
  %v322 = vpop.permute.xlu0 %321
  %323 = vrot.lane.b32.xlu0 %v311, 127
  %v324 = vpop.permute.xlu0 %323
  %325 = vrot.lane.b32.xlu0 %v314, 127
  %v326 = vpop.permute.xlu0 %325
  %vm327 = vcmp.lt.s32.totalorder %v201, 127
  %v328 = vsel %vm327, %v320, %v324
  %v329 = vsel %vm327, %v322, %v326
  %v330 = vsel %vm327, %v316, %v320
  %v331 = vsel %vm327, %v318, %v322
  %v332 = vsel %vm327, %v324, %v316
  %v333 = vsel %vm327, %v326, %v318
  %334 = vrot.lane.b32.xlu0 %v309, 126
  %v335 = vpop.permute.xlu0 %334
  %336 = vrot.lane.b32.xlu0 %v312, 126
  %v337 = vpop.permute.xlu0 %336
  %338 = vrot.lane.b32.xlu0 %v310, 126
  %v339 = vpop.permute.xlu0 %338
  %340 = vrot.lane.b32.xlu0 %v313, 126
  %v341 = vpop.permute.xlu0 %340
  %342 = vrot.lane.b32.xlu0 %v311, 126
  %v343 = vpop.permute.xlu0 %342
  %344 = vrot.lane.b32.xlu0 %v314, 126
  %v345 = vpop.permute.xlu0 %344
  %vm346 = vcmp.lt.s32.totalorder %v201, 126
  %v347 = vsel %vm346, %v339, %v343
  %v348 = vsel %vm346, %v341, %v345
  %v349 = vsel %vm346, %v335, %v339
  %v350 = vsel %vm346, %v337, %v341
  %v351 = vsel %vm346, %v343, %v335
  %v352 = vsel %vm346, %v345, %v337
  %353 = vrot.lane.b32.xlu0 %v309, 125
  %v354 = vpop.permute.xlu0 %353
  %355 = vrot.lane.b32.xlu0 %v312, 125
  %v356 = vpop.permute.xlu0 %355
  %357 = vrot.lane.b32.xlu0 %v310, 125
  %v358 = vpop.permute.xlu0 %357
  %359 = vrot.lane.b32.xlu0 %v313, 125
  %v360 = vpop.permute.xlu0 %359
  %361 = vrot.lane.b32.xlu0 %v311, 125
  %v362 = vpop.permute.xlu0 %361
  %363 = vrot.lane.b32.xlu0 %v314, 125
  %v364 = vpop.permute.xlu0 %363
  %vm365 = vcmp.lt.s32.totalorder %v201, 125
  %v366 = vsel %vm365, %v358, %v362
  %v367 = vsel %vm365, %v360, %v364
  %v368 = vsel %vm365, %v354, %v358
  %v369 = vsel %vm365, %v356, %v360
  %v370 = vsel %vm365, %v362, %v354
  %v371 = vsel %vm365, %v364, %v356
  %372 = vrot.lane.b32.xlu0 %v309, 115
  %v373 = vpop.permute.xlu0 %372
  %374 = vrot.lane.b32.xlu0 %v312, 115
  %v375 = vpop.permute.xlu0 %374
  %376 = vrot.lane.b32.xlu0 %v310, 115
  %v377 = vpop.permute.xlu0 %376
  %378 = vrot.lane.b32.xlu0 %v313, 115
  %v379 = vpop.permute.xlu0 %378
  %380 = vrot.lane.b32.xlu0 %v311, 115
  %v381 = vpop.permute.xlu0 %380
  %382 = vrot.lane.b32.xlu0 %v314, 115
  %v383 = vpop.permute.xlu0 %382
  %vm384 = vcmp.lt.s32.totalorder %v201, 115
  %v385 = vsel %vm384, %v377, %v381
  %v386 = vsel %vm384, %v379, %v383
  %v387 = vsel %vm384, %v373, %v377
  %v388 = vsel %vm384, %v375, %v379
  %v389 = vsel %vm384, %v381, %v373
  %v390 = vsel %vm384, %v383, %v375
  %391 = vrot.lane.b32.xlu0 %v309, 114
  %v392 = vpop.permute.xlu0 %391
  %393 = vrot.lane.b32.xlu0 %v312, 114
  %v394 = vpop.permute.xlu0 %393
  %395 = vrot.lane.b32.xlu0 %v310, 114
  %v396 = vpop.permute.xlu0 %395
  %397 = vrot.lane.b32.xlu0 %v313, 114
  %v398 = vpop.permute.xlu0 %397
  %399 = vrot.lane.b32.xlu0 %v311, 114
  %v400 = vpop.permute.xlu0 %399
  %401 = vrot.lane.b32.xlu0 %v314, 114
  %v402 = vpop.permute.xlu0 %401
  %vm403 = vcmp.lt.s32.totalorder %v201, 114
  %v404 = vsel %vm403, %v396, %v400
  %v405 = vsel %vm403, %v398, %v402
  %v406 = vsel %vm403, %v392, %v396
  %v407 = vsel %vm403, %v394, %v398
  %v408 = vsel %vm403, %v400, %v392
  %v409 = vsel %vm403, %v402, %v394
  %410 = vrot.lane.b32.xlu0 %v309, 113
  %v411 = vpop.permute.xlu0 %410
  %412 = vrot.lane.b32.xlu0 %v312, 113
  %v413 = vpop.permute.xlu0 %412
  %414 = vrot.lane.b32.xlu0 %v310, 113
  %v415 = vpop.permute.xlu0 %414
  %416 = vrot.lane.b32.xlu0 %v313, 113
  %v417 = vpop.permute.xlu0 %416
  %418 = vrot.lane.b32.xlu0 %v311, 113
  %v419 = vpop.permute.xlu0 %418
  %420 = vrot.lane.b32.xlu0 %v314, 113
  %v421 = vpop.permute.xlu0 %420
  %vm422 = vcmp.lt.s32.totalorder %v201, 113
  %v423 = vsel %vm422, %v415, %v419
  %v424 = vsel %vm422, %v417, %v421
  %v425 = vsel %vm422, %v411, %v415
  %v426 = vsel %vm422, %v413, %v417
  %v427 = vsel %vm422, %v419, %v411
  %v428 = vsel %vm422, %v421, %v413
  %429 = vrot.lane.b32.xlu0 %v309, 112
  %v430 = vpop.permute.xlu0 %429
  %431 = vrot.lane.b32.xlu0 %v312, 112
  %v432 = vpop.permute.xlu0 %431
  %433 = vrot.lane.b32.xlu0 %v310, 112
  %v434 = vpop.permute.xlu0 %433
  %435 = vrot.lane.b32.xlu0 %v313, 112
  %v436 = vpop.permute.xlu0 %435
  %437 = vrot.lane.b32.xlu0 %v311, 112
  %v438 = vpop.permute.xlu0 %437
  %439 = vrot.lane.b32.xlu0 %v314, 112
  %v440 = vpop.permute.xlu0 %439
  %vm441 = vcmp.lt.s32.totalorder %v201, 112
  %v442 = vsel %vm441, %v434, %v438
  %v443 = vsel %vm441, %v436, %v440
  %v444 = vsel %vm441, %v430, %v434
  %v445 = vsel %vm441, %v432, %v436
  %v446 = vsel %vm441, %v438, %v430
  %v447 = vsel %vm441, %v440, %v432
  %448 = vrot.lane.b32.xlu0 %v309, 102
  %v449 = vpop.permute.xlu0 %448
  %450 = vrot.lane.b32.xlu0 %v312, 102
  %v451 = vpop.permute.xlu0 %450
  %452 = vrot.lane.b32.xlu0 %v310, 102
  %v453 = vpop.permute.xlu0 %452
  %454 = vrot.lane.b32.xlu0 %v313, 102
  %v455 = vpop.permute.xlu0 %454
  %456 = vrot.lane.b32.xlu0 %v311, 102
  %v457 = vpop.permute.xlu0 %456
  %458 = vrot.lane.b32.xlu0 %v314, 102
  %v459 = vpop.permute.xlu0 %458
  %vm460 = vcmp.lt.s32.totalorder %v201, 102
  %v461 = vsel %vm460, %v453, %v457
  %v462 = vsel %vm460, %v455, %v459
  %v463 = vsel %vm460, %v449, %v453
  %v464 = vsel %vm460, %v451, %v455
  %v465 = vsel %vm460, %v457, %v449
  %v466 = vsel %vm460, %v459, %v451
  %467 = vrot.lane.b32.xlu0 %v309, 101
  %v468 = vpop.permute.xlu0 %467
  %469 = vrot.lane.b32.xlu0 %v312, 101
  %v470 = vpop.permute.xlu0 %469
  %471 = vrot.lane.b32.xlu0 %v310, 101
  %v472 = vpop.permute.xlu0 %471
  %473 = vrot.lane.b32.xlu0 %v313, 101
  %v474 = vpop.permute.xlu0 %473
  %475 = vrot.lane.b32.xlu0 %v311, 101
  %v476 = vpop.permute.xlu0 %475
  %477 = vrot.lane.b32.xlu0 %v314, 101
  %v478 = vpop.permute.xlu0 %477
  %vm479 = vcmp.lt.s32.totalorder %v201, 101
  %v480 = vsel %vm479, %v472, %v476
  %v481 = vsel %vm479, %v474, %v478
  %v482 = vsel %vm479, %v468, %v472
  %v483 = vsel %vm479, %v470, %v474
  %v484 = vsel %vm479, %v476, %v468
  %v485 = vsel %vm479, %v478, %v470
  %486 = vrot.lane.b32.xlu0 %v309, 100
  %v487 = vpop.permute.xlu0 %486
  %488 = vrot.lane.b32.xlu0 %v312, 100
  %v489 = vpop.permute.xlu0 %488
  %490 = vrot.lane.b32.xlu0 %v310, 100
  %v491 = vpop.permute.xlu0 %490
  %492 = vrot.lane.b32.xlu0 %v313, 100
  %v493 = vpop.permute.xlu0 %492
  %494 = vrot.lane.b32.xlu0 %v311, 100
  %v495 = vpop.permute.xlu0 %494
  %496 = vrot.lane.b32.xlu0 %v314, 100
  %v497 = vpop.permute.xlu0 %496
  %vm498 = vcmp.lt.s32.totalorder %v201, 100
  %v499 = vsel %vm498, %v491, %v495
  %v500 = vsel %vm498, %v493, %v497
  %v501 = vsel %vm498, %v487, %v491
  %v502 = vsel %vm498, %v489, %v493
  %v503 = vsel %vm498, %v495, %v487
  %v504 = vsel %vm498, %v497, %v489
  %505 = vrot.lane.b32.xlu0 %v309, 99
  %v506 = vpop.permute.xlu0 %505
  %507 = vrot.lane.b32.xlu0 %v312, 99
  %v508 = vpop.permute.xlu0 %507
  %509 = vrot.lane.b32.xlu0 %v310, 99
  %v510 = vpop.permute.xlu0 %509
  %511 = vrot.lane.b32.xlu0 %v313, 99
  %v512 = vpop.permute.xlu0 %511
  %513 = vrot.lane.b32.xlu0 %v311, 99
  %v514 = vpop.permute.xlu0 %513
  %515 = vrot.lane.b32.xlu0 %v314, 99
  %v516 = vpop.permute.xlu0 %515
  %vm517 = vcmp.lt.s32.totalorder %v201, 99
  %v518 = vsel %vm517, %v510, %v514
  %v519 = vsel %vm517, %v512, %v516
  %v520 = vsel %vm517, %v506, %v510
  %v521 = vsel %vm517, %v508, %v512
  %v522 = vsel %vm517, %v514, %v506
  %v523 = vsel %vm517, %v516, %v508
  %524 = vrot.lane.b32.xlu0 %v309, 89
  %v525 = vpop.permute.xlu0 %524
  %526 = vrot.lane.b32.xlu0 %v312, 89
  %v527 = vpop.permute.xlu0 %526
  %528 = vrot.lane.b32.xlu0 %v310, 89
  %v529 = vpop.permute.xlu0 %528
  %530 = vrot.lane.b32.xlu0 %v313, 89
  %v531 = vpop.permute.xlu0 %530
  %532 = vrot.lane.b32.xlu0 %v311, 89
  %v533 = vpop.permute.xlu0 %532
  %534 = vrot.lane.b32.xlu0 %v314, 89
  %v535 = vpop.permute.xlu0 %534
  %vm536 = vcmp.lt.s32.totalorder %v201, 89
  %v537 = vsel %vm536, %v529, %v533
  %v538 = vsel %vm536, %v531, %v535
  %v539 = vsel %vm536, %v525, %v529
  %v540 = vsel %vm536, %v527, %v531
  %v541 = vsel %vm536, %v533, %v525
  %v542 = vsel %vm536, %v535, %v527
  %543 = vrot.lane.b32.xlu0 %v309, 88
  %v544 = vpop.permute.xlu0 %543
  %545 = vrot.lane.b32.xlu0 %v312, 88
  %v546 = vpop.permute.xlu0 %545
  %547 = vrot.lane.b32.xlu0 %v310, 88
  %v548 = vpop.permute.xlu0 %547
  %549 = vrot.lane.b32.xlu0 %v313, 88
  %v550 = vpop.permute.xlu0 %549
  %551 = vrot.lane.b32.xlu0 %v311, 88
  %v552 = vpop.permute.xlu0 %551
  %553 = vrot.lane.b32.xlu0 %v314, 88
  %v554 = vpop.permute.xlu0 %553
  %vm555 = vcmp.lt.s32.totalorder %v201, 88
  %v556 = vsel %vm555, %v548, %v552
  %v557 = vsel %vm555, %v550, %v554
  %v558 = vsel %vm555, %v544, %v548
  %v559 = vsel %vm555, %v546, %v550
  %v560 = vsel %vm555, %v552, %v544
  %v561 = vsel %vm555, %v554, %v546
  %562 = vrot.lane.b32.xlu0 %v309, 87
  %v563 = vpop.permute.xlu0 %562
  %564 = vrot.lane.b32.xlu0 %v312, 87
  %v565 = vpop.permute.xlu0 %564
  %566 = vrot.lane.b32.xlu0 %v310, 87
  %v567 = vpop.permute.xlu0 %566
  %568 = vrot.lane.b32.xlu0 %v313, 87
  %v569 = vpop.permute.xlu0 %568
  %570 = vrot.lane.b32.xlu0 %v311, 87
  %v571 = vpop.permute.xlu0 %570
  %572 = vrot.lane.b32.xlu0 %v314, 87
  %v573 = vpop.permute.xlu0 %572
  %vm574 = vcmp.lt.s32.totalorder %v201, 87
  %v575 = vsel %vm574, %v567, %v571
  %v576 = vsel %vm574, %v569, %v573
  %v577 = vsel %vm574, %v563, %v567
  %v578 = vsel %vm574, %v565, %v569
  %v579 = vsel %vm574, %v571, %v563
  %v580 = vsel %vm574, %v573, %v565
  %581 = vrot.lane.b32.xlu0 %v309, 86
  %v582 = vpop.permute.xlu0 %581
  %583 = vrot.lane.b32.xlu0 %v312, 86
  %v584 = vpop.permute.xlu0 %583
  %585 = vrot.lane.b32.xlu0 %v310, 86
  %v586 = vpop.permute.xlu0 %585
  %587 = vrot.lane.b32.xlu0 %v313, 86
  %v588 = vpop.permute.xlu0 %587
  %589 = vrot.lane.b32.xlu0 %v311, 86
  %v590 = vpop.permute.xlu0 %589
  %591 = vrot.lane.b32.xlu0 %v314, 86
  %v592 = vpop.permute.xlu0 %591
  %vm593 = vcmp.lt.s32.totalorder %v201, 86
  %v594 = vsel %vm593, %v586, %v590
  %v595 = vsel %vm593, %v588, %v592
  %v596 = vsel %vm593, %v582, %v586
  %v597 = vsel %vm593, %v584, %v588
  %v598 = vsel %vm593, %v590, %v582
  %v599 = vsel %vm593, %v592, %v584
  %v600 = vld [vmem:[%s2] sm:$0xff]
  %v601 = vld [vmem:[%s2 + $0x8] sm:$0xff]
  %v602 = vld [vmem:[%s2 + $0x10] sm:$0xff]
  %v603 = vld [vmem:[%s2 + $0x18] sm:$0xff]
  %v604 = vld [vmem:[%s2 + $0x20] sm:$0xff]
  %v605 = vld [vmem:[%s2 + $0x28] sm:$0xff]
  %v606 = vld [vmem:[%s2 + $0x30] sm:$0xff]
  %v607 = vld [vmem:[%s2 + $0x38] sm:$0xff]
  %608 = vmatprep.subr.mxu0 %v310
  %609 = vmatpush1.msra.mxu0 %v309
  %610 = vmatprep.subr.mxu0 %v313
  %611 = vmatpush1.msra.mxu0 %v312
  %612 = vmatprep.subr.mxu0 %v328
  %613 = vmatpush1.msra.mxu0 %v330
  %614 = vmatprep.subr.mxu0 %v329
  %615 = vmatpush1.msra.mxu0 %v331
  %616 = vmatprep.subr.mxu0 %v347
  %617 = vmatpush1.msra.mxu0 %v349
  %618 = vmatprep.subr.mxu0 %v348
  %619 = vmatpush1.msra.mxu0 %v350
  %620 = vmatprep.subr.mxu0 %v366
  %621 = vmatpush1.msra.mxu0 %v368
  %622 = vmatprep.subr.mxu0 %v367
  %623 = vmatpush1.msra.mxu0 %v369
  %624 = vmatprep.subr.mxu0 %v385
  %625 = vmatpush1.msra.mxu0 %v387
  %626 = vmatprep.subr.mxu0 %v386
  %627 = vmatpush1.msra.mxu0 %v388
  %628 = vmatprep.subr.mxu0 %v404
  %629 = vmatpush1.msra.mxu0 %v406
  %630 = vmatprep.subr.mxu0 %v405
  %631 = vmatpush1.msra.mxu0 %v407
  %632 = vmatprep.subr.mxu0 %v423
  %633 = vmatpush1.msra.mxu0 %v425
  %634 = vmatprep.subr.mxu0 %v424
  %635 = vmatpush1.msra.mxu0 %v426
  %636 = vmatprep.subr.mxu0 %v442
  %637 = vmatpush1.msra.mxu0 %v444
  %638 = vmatprep.subr.mxu0 %v443
  %639 = vmatpush1.msra.mxu0 %v445
  %640 = vmatprep.subr.mxu0 %v461
  %641 = vmatpush1.msra.mxu0 %v463
  %642 = vmatprep.subr.mxu0 %v462
  %643 = vmatpush1.msra.mxu0 %v464
  %644 = vmatprep.subr.mxu0 %v480
  %645 = vmatpush1.msra.mxu0 %v482
  %646 = vmatprep.subr.mxu0 %v481
  %647 = vmatpush1.msra.mxu0 %v483
  %648 = vmatprep.subr.mxu0 %v499
  %649 = vmatpush1.msra.mxu0 %v501
  %650 = vmatprep.subr.mxu0 %v500
  %651 = vmatpush1.msra.mxu0 %v502
  %652 = vmatprep.subr.mxu0 %v518
  %653 = vmatpush1.msra.mxu0 %v520
  %654 = vmatprep.subr.mxu0 %v519
  %655 = vmatpush1.msra.mxu0 %v521
  %656 = vmatprep.subr.mxu0 %v537
  %657 = vmatpush1.msra.mxu0 %v539
  %658 = vmatprep.subr.mxu0 %v538
  %659 = vmatpush1.msra.mxu0 %v540
  %660 = vmatprep.subr.mxu0 %v556
  %661 = vmatpush1.msra.mxu0 %v558
  %662 = vmatprep.subr.mxu0 %v557
  %663 = vmatpush1.msra.mxu0 %v559
  %664 = vmatprep.subr.mxu0 %v575
  %665 = vmatpush1.msra.mxu0 %v577
  %666 = vmatprep.subr.mxu0 %v576
  %667 = vmatpush1.msra.mxu0 %v578
  %668 = vmatprep.subr.mxu0 %v594
  %669 = vmatpush1.msra.mxu0 %v596
  %670 = vmatprep.subr.mxu0 %v595
  %671 = vmatpush1.msra.mxu0 %v597
  %672 = vmatprep.mubr.f32.mxu0 %v601
  %673 = vmatmul.mubr.f32.gmra.mrb[0].mxu0 %v600
  %v674 = vpop.f32.mrb[0].mxu0
  %v675 = vadd.f32 0.0, %v674
  %v676 = vpop.f32.mrb[0].mxu0
  %v677 = vadd.f32 0.0, %v676
  %678 = vmatprep.mubr.f32.mxu0 %v603
  %679 = vmatmul.mubr.f32.gmra.mrb[0].mxu0 %v602
  %v680 = vpop.f32.mrb[0].mxu0
  %v681 = vadd.f32 0.0, %v680
  %v682 = vpop.f32.mrb[0].mxu0
  %v683 = vadd.f32 0.0, %v682
  %684 = vmatprep.mubr.f32.mxu0 %v605
  %685 = vmatmul.mubr.f32.gmra.mrb[0].mxu0 %v604
  %v686 = vpop.f32.mrb[0].mxu0
  %v687 = vadd.f32 0.0, %v686
  %v688 = vpop.f32.mrb[0].mxu0
  %v689 = vadd.f32 0.0, %v688
  %690 = vmatprep.mubr.f32.mxu0 %v607
  %691 = vmatmul.mubr.f32.gmra.mrb[0].mxu0 %v606
  %v692 = vpop.f32.mrb[0].mxu0
  %v693 = vadd.f32 0.0, %v692
  %v694 = vpop.f32.mrb[0].mxu0
  %v695 = vadd.f32 0.0, %v694
  %696 = vdwg.mxu0
  %697 = vmatprep.subr.mxu0 0.0
  %698 = vmatpush1.msra.mxu0 %v311
  %699 = vmatprep.subr.mxu0 0.0
  %700 = vmatpush1.msra.mxu0 %v314
  %701 = vmatprep.subr.mxu0 0.0
  %702 = vmatpush1.msra.mxu0 %v332
  %703 = vmatprep.subr.mxu0 0.0
  %704 = vmatpush1.msra.mxu0 %v333
  %705 = vmatprep.subr.mxu0 0.0
  %706 = vmatpush1.msra.mxu0 %v351
  %707 = vmatprep.subr.mxu0 0.0
  %708 = vmatpush1.msra.mxu0 %v352
  %709 = vmatprep.subr.mxu0 0.0
  %710 = vmatpush1.msra.mxu0 %v370
  %711 = vmatprep.subr.mxu0 0.0
  %712 = vmatpush1.msra.mxu0 %v371
  %713 = vmatprep.subr.mxu0 0.0
  %714 = vmatpush1.msra.mxu0 %v389
  %715 = vmatprep.subr.mxu0 0.0
  %716 = vmatpush1.msra.mxu0 %v390
  %717 = vmatprep.subr.mxu0 0.0
  %718 = vmatpush1.msra.mxu0 %v408
  %719 = vmatprep.subr.mxu0 0.0
  %720 = vmatpush1.msra.mxu0 %v409
  %721 = vmatprep.subr.mxu0 0.0
  %722 = vmatpush1.msra.mxu0 %v427
  %723 = vmatprep.subr.mxu0 0.0
  %724 = vmatpush1.msra.mxu0 %v428
  %725 = vmatprep.subr.mxu0 0.0
  %726 = vmatpush1.msra.mxu0 %v446
  %727 = vmatprep.subr.mxu0 0.0
  %728 = vmatpush1.msra.mxu0 %v447
  %729 = vmatprep.subr.mxu0 0.0
  %730 = vmatpush1.msra.mxu0 %v465
  %731 = vmatprep.subr.mxu0 0.0
  %732 = vmatpush1.msra.mxu0 %v466
  %733 = vmatprep.subr.mxu0 0.0
  %734 = vmatpush1.msra.mxu0 %v484
  %735 = vmatprep.subr.mxu0 0.0
  %736 = vmatpush1.msra.mxu0 %v485
  %737 = vmatprep.subr.mxu0 0.0
  %738 = vmatpush1.msra.mxu0 %v503
  %739 = vmatprep.subr.mxu0 0.0
  %740 = vmatpush1.msra.mxu0 %v504
  %741 = vmatprep.subr.mxu0 0.0
  %742 = vmatpush1.msra.mxu0 %v522
  %743 = vmatprep.subr.mxu0 0.0
  %744 = vmatpush1.msra.mxu0 %v523
  %745 = vmatprep.subr.mxu0 0.0
  %746 = vmatpush1.msra.mxu0 %v541
  %747 = vmatprep.subr.mxu0 0.0
  %748 = vmatpush1.msra.mxu0 %v542
  %749 = vmatprep.subr.mxu0 0.0
  %750 = vmatpush1.msra.mxu0 %v560
  %751 = vmatprep.subr.mxu0 0.0
  %752 = vmatpush1.msra.mxu0 %v561
  %753 = vmatprep.subr.mxu0 0.0
  %754 = vmatpush1.msra.mxu0 %v579
  %755 = vmatprep.subr.mxu0 0.0
  %756 = vmatpush1.msra.mxu0 %v580
  %757 = vmatprep.subr.mxu0 0.0
  %758 = vmatpush1.msra.mxu0 %v598
  %759 = vmatprep.subr.mxu0 0.0
  %760 = vmatpush1.msra.mxu0 %v599
  %761 = vmatprep.mubr.f32.mxu0 %v601
  %762 = vmatmul.mubr.f32.gmra.mrb[0].mxu0 %v600
  %v763 = vpop.f32.mrb[0].mxu0
  %v764 = vadd.f32 0.0, %v763
  %v765 = vpop.f32.mrb[0].mxu0
  %766 = vmatprep.mubr.f32.mxu0 %v603
  %767 = vmatmul.mubr.f32.gmra.mrb[0].mxu0 %v602
  %v768 = vpop.f32.mrb[0].mxu0
  %v769 = vadd.f32 0.0, %v768
  %v770 = vpop.f32.mrb[0].mxu0
  %771 = vmatprep.mubr.f32.mxu0 %v605
  %772 = vmatmul.mubr.f32.gmra.mrb[0].mxu0 %v604
  %v773 = vpop.f32.mrb[0].mxu0
  %v774 = vadd.f32 0.0, %v773
  %v775 = vpop.f32.mrb[0].mxu0
  %776 = vmatprep.mubr.f32.mxu0 %v607
  %777 = vmatmul.mubr.f32.gmra.mrb[0].mxu0 %v606
  %v778 = vpop.f32.mrb[0].mxu0
  %v779 = vadd.f32 0.0, %v778
  %v780 = vpop.f32.mrb[0].mxu0
  %781 = vdwg.mxu0
  %v782 = vld [vmem:[%s4] sm:$0xff]
  %v783 = vld [vmem:[%s4 + $0x8] sm:$0xff]
  %v784 = vld [vmem:[%s4 + $0x10] sm:$0xff]
  %v785 = vld [vmem:[%s4 + $0x18] sm:$0xff]
  %v786 = vld [vmem:[%s4 + $0x20] sm:$0xff]
  %v787 = vld [vmem:[%s4 + $0x28] sm:$0xff]
  %v788 = vld [vmem:[%s4 + $0x30] sm:$0xff]
  %v789 = vld [vmem:[%s4 + $0x38] sm:$0xff]
  %v790 = vld [vmem:[%s4 + $0x40] sm:$0xff]
  %v791 = vld [vmem:[%s4 + $0x48] sm:$0xff]
  %v792 = vld [vmem:[%s4 + $0x50] sm:$0xff]
  %v793 = vld [vmem:[%s4 + $0x58] sm:$0xff]
  %v794 = vld [vmem:[%s4 + $0x60] sm:$0xff]
  %v795 = vld [vmem:[%s4 + $0x68] sm:$0xff]
  %v796 = vld [vmem:[%s4 + $0x70] sm:$0xff]
  %v797 = vld [vmem:[%s4 + $0x78] sm:$0xff]
  %v798 = vld [vmem:[%s4 + $0x80] sm:$0xff]
  %v799 = vld [vmem:[%s4 + $0x88] sm:$0xff]
  %v800 = vld [vmem:[%s4 + $0x90] sm:$0xff]
  %v801 = vld [vmem:[%s4 + $0x98] sm:$0xff]
  %v802 = vld [vmem:[%s4 + $0xa0] sm:$0xff]
  %v803 = vld [vmem:[%s4 + $0xa8] sm:$0xff]
  %v804 = vld [vmem:[%s4 + $0xb0] sm:$0xff]
  %v805 = vld [vmem:[%s4 + $0xb8] sm:$0xff]
  %v806 = vld [vmem:[%s4 + $0xc0] sm:$0xff]
  %v807 = vld [vmem:[%s4 + $0xc8] sm:$0xff]
  %v808 = vld [vmem:[%s4 + $0xd0] sm:$0xff]
  %v809 = vld [vmem:[%s4 + $0xd8] sm:$0xff]
  %v810 = vld [vmem:[%s4 + $0xe0] sm:$0xff]
  %v811 = vld [vmem:[%s4 + $0xe8] sm:$0xff]
  %v812 = vld [vmem:[%s4 + $0xf0] sm:$0xff]
  %v813 = vld [vmem:[%s4 + $0xf8] sm:$0xff]
  %v814 = vld [vmem:[%s4 + $0x100] sm:$0xff]
  %v815 = vld [vmem:[%s4 + $0x108] sm:$0xff]
  %v816 = vld [vmem:[%s4 + $0x110] sm:$0xff]
  %v817 = vld [vmem:[%s4 + $0x118] sm:$0xff]
  %v818 = vld [vmem:[%s4 + $0x120] sm:$0xff]
  %v819 = vld [vmem:[%s4 + $0x128] sm:$0xff]
  %v820 = vld [vmem:[%s4 + $0x130] sm:$0xff]
  %v821 = vld [vmem:[%s4 + $0x138] sm:$0xff]
  %v822 = vld [vmem:[%s4 + $0x140] sm:$0xff]
  %v823 = vld [vmem:[%s4 + $0x148] sm:$0xff]
  %v824 = vld [vmem:[%s4 + $0x150] sm:$0xff]
  %v825 = vld [vmem:[%s4 + $0x158] sm:$0xff]
  %v826 = vld [vmem:[%s4 + $0x160] sm:$0xff]
  %v827 = vld [vmem:[%s4 + $0x168] sm:$0xff]
  %v828 = vld [vmem:[%s4 + $0x170] sm:$0xff]
  %v829 = vld [vmem:[%s4 + $0x178] sm:$0xff]
  %830 = vmatprep.subr.mxu0 0.0
  %831 = vmatpush1.msra.mxu0 %v782
  %832 = vmatprep.subr.mxu0 0.0
  %833 = vmatpush1.msra.mxu0 %v783
  %834 = vmatprep.subr.mxu0 0.0
  %835 = vmatpush1.msra.mxu0 %v784
  %836 = vmatprep.subr.mxu0 0.0
  %837 = vmatpush1.msra.mxu0 %v785
  %838 = vmatprep.subr.mxu0 0.0
  %839 = vmatpush1.msra.mxu0 %v786
  %840 = vmatprep.subr.mxu0 0.0
  %841 = vmatpush1.msra.mxu0 %v787
  %842 = vmatprep.subr.mxu0 0.0
  %843 = vmatpush1.msra.mxu0 %v788
  %844 = vmatprep.subr.mxu0 0.0
  %845 = vmatpush1.msra.mxu0 %v789
  %846 = vmatprep.subr.mxu0 0.0
  %847 = vmatpush1.msra.mxu0 %v790
  %848 = vmatprep.subr.mxu0 0.0
  %849 = vmatpush1.msra.mxu0 %v791
  %850 = vmatprep.subr.mxu0 0.0
  %851 = vmatpush1.msra.mxu0 %v792
  %852 = vmatprep.subr.mxu0 0.0
  %853 = vmatpush1.msra.mxu0 %v793
  %854 = vmatprep.subr.mxu0 0.0
  %855 = vmatpush1.msra.mxu0 %v794
  %856 = vmatprep.subr.mxu0 0.0
  %857 = vmatpush1.msra.mxu0 %v795
  %858 = vmatprep.subr.mxu0 0.0
  %859 = vmatpush1.msra.mxu0 %v796
  %860 = vmatprep.subr.mxu0 0.0
  %861 = vmatpush1.msra.mxu0 %v797
  %862 = vmatprep.subr.mxu0 0.0
  %863 = vmatpush1.msra.mxu0 %v798
  %864 = vmatprep.subr.mxu0 0.0
  %865 = vmatpush1.msra.mxu0 %v799
  %866 = vmatprep.subr.mxu0 0.0
  %867 = vmatpush1.msra.mxu0 %v800
  %868 = vmatprep.subr.mxu0 0.0
  %869 = vmatpush1.msra.mxu0 %v801
  %870 = vmatprep.subr.mxu0 0.0
  %871 = vmatpush1.msra.mxu0 %v802
  %872 = vmatprep.subr.mxu0 0.0
  %873 = vmatpush1.msra.mxu0 %v803
  %874 = vmatprep.subr.mxu0 0.0
  %875 = vmatpush1.msra.mxu0 %v804
  %876 = vmatprep.subr.mxu0 0.0
  %877 = vmatpush1.msra.mxu0 %v805
  %878 = vmatprep.subr.mxu0 0.0
  %879 = vmatpush1.msra.mxu0 %v806
  %880 = vmatprep.subr.mxu0 0.0
  %881 = vmatpush1.msra.mxu0 %v807
  %882 = vmatprep.subr.mxu0 0.0
  %883 = vmatpush1.msra.mxu0 %v808
  %884 = vmatprep.subr.mxu0 0.0
  %885 = vmatpush1.msra.mxu0 %v809
  %886 = vmatprep.subr.mxu0 0.0
  %887 = vmatpush1.msra.mxu0 %v810
  %888 = vmatprep.subr.mxu0 0.0
  %889 = vmatpush1.msra.mxu0 %v811
  %890 = vmatprep.subr.mxu0 0.0
  %891 = vmatpush1.msra.mxu0 %v812
  %892 = vmatprep.subr.mxu0 0.0
  %893 = vmatpush1.msra.mxu0 %v813
  %894 = vmatprep.mubr.f32.mxu0 %v677
  %895 = vmatmul.mubr.f32.gmra.mrb[0].mxu0 %v675
  %v896 = vpop.f32.mrb[0].mxu0
  %v897 = vadd.f32 0.0, %v896
  %v898 = vpop.f32.mrb[0].mxu0
  %899 = vmatprep.mubr.f32.mxu0 %v683
  %900 = vmatmul.mubr.f32.gmra.mrb[0].mxu0 %v681
  %v901 = vpop.f32.mrb[0].mxu0
  %v902 = vadd.f32 0.0, %v901
  %v903 = vpop.f32.mrb[0].mxu0
  %904 = vmatprep.mubr.f32.mxu0 %v689
  %905 = vmatmul.mubr.f32.gmra.mrb[0].mxu0 %v687
  %v906 = vpop.f32.mrb[0].mxu0
  %v907 = vadd.f32 0.0, %v906
  %v908 = vpop.f32.mrb[0].mxu0
  %909 = vmatprep.mubr.f32.mxu0 %v695
  %910 = vmatmul.mubr.f32.gmra.mrb[0].mxu0 %v693
  %v911 = vpop.f32.mrb[0].mxu0
  %v912 = vadd.f32 0.0, %v911
  %v913 = vpop.f32.mrb[0].mxu0
  %914 = vdwg.mxu0
  %915 = vmatprep.subr.mxu0 0.0
  %916 = vmatpush1.msra.mxu0 %v814
  %917 = vmatprep.subr.mxu0 0.0
  %918 = vmatpush1.msra.mxu0 %v815
  %919 = vmatprep.subr.mxu0 0.0
  %920 = vmatpush1.msra.mxu0 %v816
  %921 = vmatprep.subr.mxu0 0.0
  %922 = vmatpush1.msra.mxu0 %v817
  %923 = vmatprep.subr.mxu0 0.0
  %924 = vmatpush1.msra.mxu0 %v818
  %925 = vmatprep.subr.mxu0 0.0
  %926 = vmatpush1.msra.mxu0 %v819
  %927 = vmatprep.subr.mxu0 0.0
  %928 = vmatpush1.msra.mxu0 %v820
  %929 = vmatprep.subr.mxu0 0.0
  %930 = vmatpush1.msra.mxu0 %v821
  %931 = vmatprep.subr.mxu0 0.0
  %932 = vmatpush1.msra.mxu0 %v822
  %933 = vmatprep.subr.mxu0 0.0
  %934 = vmatpush1.msra.mxu0 %v823
  %935 = vmatprep.subr.mxu0 0.0
  %936 = vmatpush1.msra.mxu0 %v824
  %937 = vmatprep.subr.mxu0 0.0
  %938 = vmatpush1.msra.mxu0 %v825
  %939 = vmatprep.subr.mxu0 0.0
  %940 = vmatpush1.msra.mxu0 %v826
  %941 = vmatprep.subr.mxu0 0.0
  %942 = vmatpush1.msra.mxu0 %v827
  %943 = vmatprep.subr.mxu0 0.0
  %944 = vmatpush1.msra.mxu0 %v828
  %945 = vmatprep.subr.mxu0 0.0
  %946 = vmatpush1.msra.mxu0 %v829
  %947 = vmatprep.subr.mxu0 0.0
  %948 = vmatpush1.msra.mxu0 0.0
  %949 = vmatprep.subr.mxu0 0.0
  %950 = vmatpush1.msra.mxu0 0.0
  %951 = vmatprep.subr.mxu0 0.0
  %952 = vmatpush1.msra.mxu0 0.0
  %953 = vmatprep.subr.mxu0 0.0
  %954 = vmatpush1.msra.mxu0 0.0
  %955 = vmatprep.subr.mxu0 0.0
  %956 = vmatpush1.msra.mxu0 0.0
  %957 = vmatprep.subr.mxu0 0.0
  %958 = vmatpush1.msra.mxu0 0.0
  %959 = vmatprep.subr.mxu0 0.0
  %960 = vmatpush1.msra.mxu0 0.0
  %961 = vmatprep.subr.mxu0 0.0
  %962 = vmatpush1.msra.mxu0 0.0
  %963 = vmatprep.subr.mxu0 0.0
  %964 = vmatpush1.msra.mxu0 0.0
  %965 = vmatprep.subr.mxu0 0.0
  %966 = vmatpush1.msra.mxu0 0.0
  %967 = vmatprep.subr.mxu0 0.0
  %968 = vmatpush1.msra.mxu0 0.0
  %969 = vmatprep.subr.mxu0 0.0
  %970 = vmatpush1.msra.mxu0 0.0
  %971 = vmatprep.subr.mxu0 0.0
  %972 = vmatpush1.msra.mxu0 0.0
  %973 = vmatprep.subr.mxu0 0.0
  %974 = vmatpush1.msra.mxu0 0.0
  %975 = vmatprep.subr.mxu0 0.0
  %976 = vmatpush1.msra.mxu0 0.0
  %977 = vmatprep.subr.mxu0 0.0
  %978 = vmatpush1.msra.mxu0 0.0
  %979 = vmatprep.mubr.f32.mxu0 0.0
  %980 = vmatmul.mubr.f32.gmra.mrb[0].mxu0 %v764
  %v981 = vpop.f32.mrb[0].mxu0
  %v982 = vadd.f32 %v897, %v981
  %v983 = vpop.f32.mrb[0].mxu0
  %984 = vmatprep.mubr.f32.mxu0 0.0
  %985 = vmatmul.mubr.f32.gmra.mrb[0].mxu0 %v769
  %v986 = vpop.f32.mrb[0].mxu0
  %v987 = vadd.f32 %v902, %v986
  %v988 = vpop.f32.mrb[0].mxu0
  %989 = vmatprep.mubr.f32.mxu0 0.0
  %990 = vmatmul.mubr.f32.gmra.mrb[0].mxu0 %v774
  %v991 = vpop.f32.mrb[0].mxu0
  %v992 = vadd.f32 %v907, %v991
  %v993 = vpop.f32.mrb[0].mxu0
  %994 = vmatprep.mubr.f32.mxu0 0.0
  %995 = vmatmul.mubr.f32.gmra.mrb[0].mxu0 %v779
  %v996 = vpop.f32.mrb[0].mxu0
  %v997 = vadd.f32 %v912, %v996
  %v998 = vpop.f32.mrb[0].mxu0
  %999 = vdwg.mxu0
  %vm1000 = vcmp.lt.s32.totalorder %v201, 50
  %v1001 = vsel %vm1000, %v982, 0.0
  %v1002 = vsel %vm1000, %v987, 0.0
  %v1003 = vsel %vm1000, %v992, 0.0
  %v1004 = vsel %vm1000, %v997, 0.0
  %1005 = vadd.xlane.f32.xlu0 %v1001
  %v1006 = vpop.xlane.xlu0 %1005
  %1007 = vadd.xlane.f32.xlu0 %v1002
  %v1008 = vpop.xlane.xlu0 %1007
  %1009 = vadd.xlane.f32.xlu0 %v1003
  %v1010 = vpop.xlane.xlu0 %1009
  %1011 = vadd.xlane.f32.xlu0 %v1004
  %v1012 = vpop.xlane.xlu0 %1011
  %v1013 = vmul.f32 %v1006, 0.02
  %v1014 = vmul.f32 %v1008, 0.02
  %v1015 = vmul.f32 %v1010, 0.02
  %v1016 = vmul.f32 %v1012, 0.02
  %v1017 = vsub.f32 %v982, %v1013
  %v1018 = vsub.f32 %v987, %v1014
  %v1019 = vsub.f32 %v992, %v1015
  %v1020 = vsub.f32 %v997, %v1016
  %v1021 = vsel %vm1000, %v1017, 0.0
  %v1022 = vsel %vm1000, %v1018, 0.0
  %v1023 = vsel %vm1000, %v1019, 0.0
  %v1024 = vsel %vm1000, %v1020, 0.0
  %v1025 = vmul.f32 %v1021, %v1021
  %v1026 = vmul.f32 %v1022, %v1022
  %v1027 = vmul.f32 %v1023, %v1023
  %v1028 = vmul.f32 %v1024, %v1024
  %1029 = vadd.xlane.f32.xlu0 %v1025
  %v1030 = vpop.xlane.xlu0 %1029
  %1031 = vadd.xlane.f32.xlu0 %v1026
  %v1032 = vpop.xlane.xlu0 %1031
  %1033 = vadd.xlane.f32.xlu0 %v1027
  %v1034 = vpop.xlane.xlu0 %1033
  %1035 = vadd.xlane.f32.xlu0 %v1028
  %v1036 = vpop.xlane.xlu0 %1035
  %v1037 = vmul.f32 %v1030, 0.02
  %v1038 = vmul.f32 %v1032, 0.02
  %v1039 = vmul.f32 %v1034, 0.02
  %v1040 = vmul.f32 %v1036, 0.02
  %v1041 = vld [vmem:[%s7] sm:$0xff]
  %v1042 = vld [vmem:[%s7 + $0x8] sm:$0xff]
  %v1043 = vld [vmem:[%s7 + $0x10] sm:$0xff]
  %v1044 = vld [vmem:[%s7 + $0x18] sm:$0xff]
  %v1045 = vadd.f32 %v1037, 1e-05
  %v1046 = vadd.f32 %v1038, 1e-05
  %v1047 = vadd.f32 %v1039, 1e-05
  %v1048 = vadd.f32 %v1040, 1e-05
  %v1049 = vrsqrt.pop %v1045
  %v1050 = vrsqrt.pop %v1046
  %v1051 = vrsqrt.pop %v1047
  %v1052 = vrsqrt.pop %v1048
  %v1053 = vmul.f32 %v1041, %v1049
  %v1054 = vmul.f32 %v1042, %v1050
  %v1055 = vmul.f32 %v1043, %v1051
  %v1056 = vmul.f32 %v1044, %v1052
  %v1057 = vmul.f32 %v1013, %v1053
  %v1058 = vmul.f32 %v1014, %v1054
  %v1059 = vmul.f32 %v1015, %v1055
  %v1060 = vmul.f32 %v1016, %v1056
  %1065 = vrot.lane.b32.xlu0 %v1057, 1
  %v1066 = vpop.permute.xlu0 %1065
  %1067 = vrot.lane.b32.xlu0 %v1058, 1
  %v1068 = vpop.permute.xlu0 %1067
  %1069 = vrot.lane.b32.xlu0 %v1059, 1
  %v1070 = vpop.permute.xlu0 %1069
  %1071 = vrot.lane.b32.xlu0 %v1060, 1
  %v1072 = vpop.permute.xlu0 %1071
  %v1077 = vsub.f32 %v1041, %v1066
  %v1078 = vsub.f32 %v1042, %v1068
  %v1079 = vsub.f32 %v1043, %v1070
  %v1080 = vsub.f32 %v1044, %v1072
  %1082 = vset.pattern.permute.xlu0 0
  %1083 = vperm.xlu0 %1082, %v1053
  %v1084 = vpop.permute.xlu0 %1083
  %1087 = vset.pattern.permute.xlu0 0
  %1088 = vperm.xlu0 %1087, %v1054
  %v1089 = vpop.permute.xlu0 %1088
  %1092 = vset.pattern.permute.xlu0 0
  %1093 = vperm.xlu0 %1092, %v1055
  %v1094 = vpop.permute.xlu0 %1093
  %1097 = vset.pattern.permute.xlu0 0
  %1098 = vperm.xlu0 %1097, %v1056
  %v1099 = vpop.permute.xlu0 %1098
  %v1101 = vmul.f32 %v982, %v1084
  %v1102 = vmul.f32 %v987, %v1089
  %v1103 = vmul.f32 %v992, %v1094
  %v1104 = vmul.f32 %v997, %v1099
  %1106 = vset.pattern.permute.xlu0 1
  %1107 = vperm.xlu0 %1106, %v1077
  %v1108 = vpop.permute.xlu0 %1107
  %1111 = vset.pattern.permute.xlu0 1
  %1112 = vperm.xlu0 %1111, %v1078
  %v1113 = vpop.permute.xlu0 %1112
  %1116 = vset.pattern.permute.xlu0 1
  %1117 = vperm.xlu0 %1116, %v1079
  %v1118 = vpop.permute.xlu0 %1117
  %1121 = vset.pattern.permute.xlu0 1
  %1122 = vperm.xlu0 %1121, %v1080
  %v1123 = vpop.permute.xlu0 %1122
  %v1125 = vadd.f32 %v1101, %v1108
  %v1126 = vadd.f32 %v1102, %v1113
  %v1127 = vadd.f32 %v1103, %v1118
  %v1128 = vadd.f32 %v1104, %v1123
  %v1129 = vmul.f32 %v1125, 0.2
  %v1130 = vmul.f32 %v1126, 0.2
  %v1131 = vmul.f32 %v1127, 0.2
  %v1132 = vmul.f32 %v1128, 0.2
  %v1133 = vmax.f32 %v1125, %v1129
  %v1134 = vmax.f32 %v1126, %v1130
  %v1135 = vmax.f32 %v1127, %v1131
  %v1136 = vmax.f32 %v1128, %v1132
  %1137 = vrot.lane.b32.xlu0 %v1133, 127
  %v1138 = vpop.permute.xlu0 %1137
  %1139 = vrot.lane.b32.xlu0 %v1134, 127
  %v1140 = vpop.permute.xlu0 %1139
  %1141 = vrot.lane.b32.xlu0 %v1135, 127
  %v1142 = vpop.permute.xlu0 %1141
  %1143 = vrot.lane.b32.xlu0 %v1136, 127
  %v1144 = vpop.permute.xlu0 %1143
  %1145 = vrot.lane.b32.xlu0 %v1133, 126
  %v1146 = vpop.permute.xlu0 %1145
  %1147 = vrot.lane.b32.xlu0 %v1134, 126
  %v1148 = vpop.permute.xlu0 %1147
  %1149 = vrot.lane.b32.xlu0 %v1135, 126
  %v1150 = vpop.permute.xlu0 %1149
  %1151 = vrot.lane.b32.xlu0 %v1136, 126
  %v1152 = vpop.permute.xlu0 %1151
  %1153 = vrot.lane.b32.xlu0 %v1133, 125
  %v1154 = vpop.permute.xlu0 %1153
  %1155 = vrot.lane.b32.xlu0 %v1134, 125
  %v1156 = vpop.permute.xlu0 %1155
  %1157 = vrot.lane.b32.xlu0 %v1135, 125
  %v1158 = vpop.permute.xlu0 %1157
  %1159 = vrot.lane.b32.xlu0 %v1136, 125
  %v1160 = vpop.permute.xlu0 %1159
  %1161 = vrot.lane.b32.xlu0 %v1133, 123
  %v1162 = vpop.permute.xlu0 %1161
  %1163 = vrot.lane.b32.xlu0 %v1134, 123
  %v1164 = vpop.permute.xlu0 %1163
  %1165 = vrot.lane.b32.xlu0 %v1135, 123
  %v1166 = vpop.permute.xlu0 %1165
  %1167 = vrot.lane.b32.xlu0 %v1136, 123
  %v1168 = vpop.permute.xlu0 %1167
  %1169 = vrot.lane.b32.xlu0 %v1133, 122
  %v1170 = vpop.permute.xlu0 %1169
  %1171 = vrot.lane.b32.xlu0 %v1134, 122
  %v1172 = vpop.permute.xlu0 %1171
  %1173 = vrot.lane.b32.xlu0 %v1135, 122
  %v1174 = vpop.permute.xlu0 %1173
  %1175 = vrot.lane.b32.xlu0 %v1136, 122
  %v1176 = vpop.permute.xlu0 %1175
  %1177 = vrot.lane.b32.xlu0 %v1133, 121
  %v1178 = vpop.permute.xlu0 %1177
  %1179 = vrot.lane.b32.xlu0 %v1134, 121
  %v1180 = vpop.permute.xlu0 %1179
  %1181 = vrot.lane.b32.xlu0 %v1135, 121
  %v1182 = vpop.permute.xlu0 %1181
  %1183 = vrot.lane.b32.xlu0 %v1136, 121
  %v1184 = vpop.permute.xlu0 %1183
  %1185 = vrot.lane.b32.xlu0 %v1133, 120
  %v1186 = vpop.permute.xlu0 %1185
  %1187 = vrot.lane.b32.xlu0 %v1134, 120
  %v1188 = vpop.permute.xlu0 %1187
  %1189 = vrot.lane.b32.xlu0 %v1135, 120
  %v1190 = vpop.permute.xlu0 %1189
  %1191 = vrot.lane.b32.xlu0 %v1136, 120
  %v1192 = vpop.permute.xlu0 %1191
  %1193 = vrot.lane.b32.xlu0 %v1133, 118
  %v1194 = vpop.permute.xlu0 %1193
  %1195 = vrot.lane.b32.xlu0 %v1134, 118
  %v1196 = vpop.permute.xlu0 %1195
  %1197 = vrot.lane.b32.xlu0 %v1135, 118
  %v1198 = vpop.permute.xlu0 %1197
  %1199 = vrot.lane.b32.xlu0 %v1136, 118
  %v1200 = vpop.permute.xlu0 %1199
  %1201 = vrot.lane.b32.xlu0 %v1133, 117
  %v1202 = vpop.permute.xlu0 %1201
  %1203 = vrot.lane.b32.xlu0 %v1134, 117
  %v1204 = vpop.permute.xlu0 %1203
  %1205 = vrot.lane.b32.xlu0 %v1135, 117
  %v1206 = vpop.permute.xlu0 %1205
  %1207 = vrot.lane.b32.xlu0 %v1136, 117
  %v1208 = vpop.permute.xlu0 %1207
  %1209 = vrot.lane.b32.xlu0 %v1133, 116
  %v1210 = vpop.permute.xlu0 %1209
  %1211 = vrot.lane.b32.xlu0 %v1134, 116
  %v1212 = vpop.permute.xlu0 %1211
  %1213 = vrot.lane.b32.xlu0 %v1135, 116
  %v1214 = vpop.permute.xlu0 %1213
  %1215 = vrot.lane.b32.xlu0 %v1136, 116
  %v1216 = vpop.permute.xlu0 %1215
  %1217 = vrot.lane.b32.xlu0 %v1133, 115
  %v1218 = vpop.permute.xlu0 %1217
  %1219 = vrot.lane.b32.xlu0 %v1134, 115
  %v1220 = vpop.permute.xlu0 %1219
  %1221 = vrot.lane.b32.xlu0 %v1135, 115
  %v1222 = vpop.permute.xlu0 %1221
  %1223 = vrot.lane.b32.xlu0 %v1136, 115
  %v1224 = vpop.permute.xlu0 %1223
  %1225 = vrot.lane.b32.xlu0 %v1133, 113
  %v1226 = vpop.permute.xlu0 %1225
  %1227 = vrot.lane.b32.xlu0 %v1134, 113
  %v1228 = vpop.permute.xlu0 %1227
  %1229 = vrot.lane.b32.xlu0 %v1135, 113
  %v1230 = vpop.permute.xlu0 %1229
  %1231 = vrot.lane.b32.xlu0 %v1136, 113
  %v1232 = vpop.permute.xlu0 %1231
  %1233 = vrot.lane.b32.xlu0 %v1133, 112
  %v1234 = vpop.permute.xlu0 %1233
  %1235 = vrot.lane.b32.xlu0 %v1134, 112
  %v1236 = vpop.permute.xlu0 %1235
  %1237 = vrot.lane.b32.xlu0 %v1135, 112
  %v1238 = vpop.permute.xlu0 %1237
  %1239 = vrot.lane.b32.xlu0 %v1136, 112
  %v1240 = vpop.permute.xlu0 %1239
  %1241 = vrot.lane.b32.xlu0 %v1133, 111
  %v1242 = vpop.permute.xlu0 %1241
  %1243 = vrot.lane.b32.xlu0 %v1134, 111
  %v1244 = vpop.permute.xlu0 %1243
  %1245 = vrot.lane.b32.xlu0 %v1135, 111
  %v1246 = vpop.permute.xlu0 %1245
  %1247 = vrot.lane.b32.xlu0 %v1136, 111
  %v1248 = vpop.permute.xlu0 %1247
  %1249 = vrot.lane.b32.xlu0 %v1133, 110
  %v1250 = vpop.permute.xlu0 %1249
  %1251 = vrot.lane.b32.xlu0 %v1134, 110
  %v1252 = vpop.permute.xlu0 %1251
  %1253 = vrot.lane.b32.xlu0 %v1135, 110
  %v1254 = vpop.permute.xlu0 %1253
  %1255 = vrot.lane.b32.xlu0 %v1136, 110
  %v1256 = vpop.permute.xlu0 %1255
  %v1257 = vld [vmem:[%s3] sm:$0xf]
  %v1259 = vlaneseq
  %v1260 = vshrl.u32 %v1259, 7
  %v1261 = vsub.s32 0, %v1260
  %v1262 = vrot.slane %v1257, %v1261
  %v1263 = vlaneseq
  %v1264 = vshrl.u32 %v1263, 7
  %v1265 = vsub.s32 1, %v1264
  %v1266 = vrot.slane %v1257, %v1265
  %v1267 = vlaneseq
  %v1268 = vshrl.u32 %v1267, 7
  %v1269 = vsub.s32 2, %v1268
  %v1270 = vrot.slane %v1257, %v1269
  %v1271 = vlaneseq
  %v1272 = vshrl.u32 %v1271, 7
  %v1273 = vsub.s32 3, %v1272
  %v1274 = vrot.slane %v1257, %v1273
  %1279 = vmatprep.subr.mxu0 0.0
  %1280 = vmatpush1.msra.mxu0 %v1133
  %1281 = vmatprep.subr.mxu0 0.0
  %1282 = vmatpush1.msra.mxu0 %v1134
  %1283 = vmatprep.subr.mxu0 0.0
  %1284 = vmatpush1.msra.mxu0 %v1135
  %1285 = vmatprep.subr.mxu0 0.0
  %1286 = vmatpush1.msra.mxu0 %v1136
  %1287 = vmatprep.subr.mxu0 0.0
  %1288 = vmatpush1.msra.mxu0 %v1138
  %1289 = vmatprep.subr.mxu0 0.0
  %1290 = vmatpush1.msra.mxu0 %v1140
  %1291 = vmatprep.subr.mxu0 0.0
  %1292 = vmatpush1.msra.mxu0 %v1142
  %1293 = vmatprep.subr.mxu0 0.0
  %1294 = vmatpush1.msra.mxu0 %v1144
  %1295 = vmatprep.subr.mxu0 0.0
  %1296 = vmatpush1.msra.mxu0 %v1146
  %1297 = vmatprep.subr.mxu0 0.0
  %1298 = vmatpush1.msra.mxu0 %v1148
  %1299 = vmatprep.subr.mxu0 0.0
  %1300 = vmatpush1.msra.mxu0 %v1150
  %1301 = vmatprep.subr.mxu0 0.0
  %1302 = vmatpush1.msra.mxu0 %v1152
  %1303 = vmatprep.subr.mxu0 0.0
  %1304 = vmatpush1.msra.mxu0 %v1154
  %1305 = vmatprep.subr.mxu0 0.0
  %1306 = vmatpush1.msra.mxu0 %v1156
  %1307 = vmatprep.subr.mxu0 0.0
  %1308 = vmatpush1.msra.mxu0 %v1158
  %1309 = vmatprep.subr.mxu0 0.0
  %1310 = vmatpush1.msra.mxu0 %v1160
  %1311 = vmatprep.subr.mxu0 0.0
  %1312 = vmatpush1.msra.mxu0 %v1162
  %1313 = vmatprep.subr.mxu0 0.0
  %1314 = vmatpush1.msra.mxu0 %v1164
  %1315 = vmatprep.subr.mxu0 0.0
  %1316 = vmatpush1.msra.mxu0 %v1166
  %1317 = vmatprep.subr.mxu0 0.0
  %1318 = vmatpush1.msra.mxu0 %v1168
  %1319 = vmatprep.subr.mxu0 0.0
  %1320 = vmatpush1.msra.mxu0 %v1170
  %1321 = vmatprep.subr.mxu0 0.0
  %1322 = vmatpush1.msra.mxu0 %v1172
  %1323 = vmatprep.subr.mxu0 0.0
  %1324 = vmatpush1.msra.mxu0 %v1174
  %1325 = vmatprep.subr.mxu0 0.0
  %1326 = vmatpush1.msra.mxu0 %v1176
  %1327 = vmatprep.subr.mxu0 0.0
  %1328 = vmatpush1.msra.mxu0 %v1178
  %1329 = vmatprep.subr.mxu0 0.0
  %1330 = vmatpush1.msra.mxu0 %v1180
  %1331 = vmatprep.subr.mxu0 0.0
  %1332 = vmatpush1.msra.mxu0 %v1182
  %1333 = vmatprep.subr.mxu0 0.0
  %1334 = vmatpush1.msra.mxu0 %v1184
  %1335 = vmatprep.subr.mxu0 0.0
  %1336 = vmatpush1.msra.mxu0 %v1186
  %1337 = vmatprep.subr.mxu0 0.0
  %1338 = vmatpush1.msra.mxu0 %v1188
  %1339 = vmatprep.subr.mxu0 0.0
  %1340 = vmatpush1.msra.mxu0 %v1190
  %1341 = vmatprep.subr.mxu0 0.0
  %1342 = vmatpush1.msra.mxu0 %v1192
  %1343 = vmatprep.mubr.f32.mxu0 %v1266
  %1344 = vmatmul.mubr.f32.gmra.mrb[0].mxu0 %v1262
  %v1345 = vpop.f32.mrb[0].mxu0
  %v1346 = vadd.f32 0.0, %v1345
  %v1347 = vpop.f32.mrb[0].mxu0
  %1348 = vdwg.mxu0
  %1349 = vmatprep.subr.mxu0 0.0
  %1350 = vmatpush1.msra.mxu0 %v1194
  %1351 = vmatprep.subr.mxu0 0.0
  %1352 = vmatpush1.msra.mxu0 %v1196
  %1353 = vmatprep.subr.mxu0 0.0
  %1354 = vmatpush1.msra.mxu0 %v1198
  %1355 = vmatprep.subr.mxu0 0.0
  %1356 = vmatpush1.msra.mxu0 %v1200
  %1357 = vmatprep.subr.mxu0 0.0
  %1358 = vmatpush1.msra.mxu0 %v1202
  %1359 = vmatprep.subr.mxu0 0.0
  %1360 = vmatpush1.msra.mxu0 %v1204
  %1361 = vmatprep.subr.mxu0 0.0
  %1362 = vmatpush1.msra.mxu0 %v1206
  %1363 = vmatprep.subr.mxu0 0.0
  %1364 = vmatpush1.msra.mxu0 %v1208
  %1365 = vmatprep.subr.mxu0 0.0
  %1366 = vmatpush1.msra.mxu0 %v1210
  %1367 = vmatprep.subr.mxu0 0.0
  %1368 = vmatpush1.msra.mxu0 %v1212
  %1369 = vmatprep.subr.mxu0 0.0
  %1370 = vmatpush1.msra.mxu0 %v1214
  %1371 = vmatprep.subr.mxu0 0.0
  %1372 = vmatpush1.msra.mxu0 %v1216
  %1373 = vmatprep.subr.mxu0 0.0
  %1374 = vmatpush1.msra.mxu0 %v1218
  %1375 = vmatprep.subr.mxu0 0.0
  %1376 = vmatpush1.msra.mxu0 %v1220
  %1377 = vmatprep.subr.mxu0 0.0
  %1378 = vmatpush1.msra.mxu0 %v1222
  %1379 = vmatprep.subr.mxu0 0.0
  %1380 = vmatpush1.msra.mxu0 %v1224
  %1381 = vmatprep.subr.mxu0 0.0
  %1382 = vmatpush1.msra.mxu0 %v1226
  %1383 = vmatprep.subr.mxu0 0.0
  %1384 = vmatpush1.msra.mxu0 %v1228
  %1385 = vmatprep.subr.mxu0 0.0
  %1386 = vmatpush1.msra.mxu0 %v1230
  %1387 = vmatprep.subr.mxu0 0.0
  %1388 = vmatpush1.msra.mxu0 %v1232
  %1389 = vmatprep.subr.mxu0 0.0
  %1390 = vmatpush1.msra.mxu0 %v1234
  %1391 = vmatprep.subr.mxu0 0.0
  %1392 = vmatpush1.msra.mxu0 %v1236
  %1393 = vmatprep.subr.mxu0 0.0
  %1394 = vmatpush1.msra.mxu0 %v1238
  %1395 = vmatprep.subr.mxu0 0.0
  %1396 = vmatpush1.msra.mxu0 %v1240
  %1397 = vmatprep.subr.mxu0 0.0
  %1398 = vmatpush1.msra.mxu0 %v1242
  %1399 = vmatprep.subr.mxu0 0.0
  %1400 = vmatpush1.msra.mxu0 %v1244
  %1401 = vmatprep.subr.mxu0 0.0
  %1402 = vmatpush1.msra.mxu0 %v1246
  %1403 = vmatprep.subr.mxu0 0.0
  %1404 = vmatpush1.msra.mxu0 %v1248
  %1405 = vmatprep.subr.mxu0 0.0
  %1406 = vmatpush1.msra.mxu0 %v1250
  %1407 = vmatprep.subr.mxu0 0.0
  %1408 = vmatpush1.msra.mxu0 %v1252
  %1409 = vmatprep.subr.mxu0 0.0
  %1410 = vmatpush1.msra.mxu0 %v1254
  %1411 = vmatprep.subr.mxu0 0.0
  %1412 = vmatpush1.msra.mxu0 %v1256
  %1413 = vmatprep.mubr.f32.mxu0 %v1274
  %1414 = vmatmul.mubr.f32.gmra.mrb[0].mxu0 %v1270
  %v1415 = vpop.f32.mrb[0].mxu0
  %v1416 = vadd.f32 %v1346, %v1415
  %v1417 = vpop.f32.mrb[0].mxu0
  %1418 = vdwg.mxu0
  %v1419 = vld [vmem:[%s5] sm:$0xff]
  %v1420 = vld [vmem:[%s5 + $0x8] sm:$0xff]
  %v1421 = vld [vmem:[%s5 + $0x10] sm:$0xff]
  %v1422 = vld [vmem:[%s5 + $0x18] sm:$0xff]
  %v1423 = vld [vmem:[%s5 + $0x20] sm:$0xff]
  %v1424 = vld [vmem:[%s5 + $0x28] sm:$0xff]
  %v1425 = vld [vmem:[%s5 + $0x30] sm:$0xff]
  %v1426 = vld [vmem:[%s5 + $0x38] sm:$0xff]
  %v1427 = vld [vmem:[%s5 + $0x40] sm:$0xff]
  %v1428 = vld [vmem:[%s5 + $0x48] sm:$0xff]
  %v1429 = vld [vmem:[%s5 + $0x50] sm:$0xff]
  %v1430 = vld [vmem:[%s5 + $0x58] sm:$0xff]
  %v1431 = vld [vmem:[%s5 + $0x60] sm:$0xff]
  %v1432 = vld [vmem:[%s5 + $0x68] sm:$0xff]
  %v1433 = vld [vmem:[%s5 + $0x70] sm:$0xff]
  %v1434 = vld [vmem:[%s5 + $0x78] sm:$0xff]
  %s1435 = sld [smem:[#allocation2]]
  %v1436 = vstv %s1435
  %1437 = vmatprep.subr.mxu0 0.0
  %1438 = vmatpush1.msra.mxu0 %v1419
  %1439 = vmatprep.subr.mxu0 0.0
  %1440 = vmatpush1.msra.mxu0 %v1420
  %1441 = vmatprep.subr.mxu0 0.0
  %1442 = vmatpush1.msra.mxu0 %v1421
  %1443 = vmatprep.subr.mxu0 0.0
  %1444 = vmatpush1.msra.mxu0 %v1422
  %1445 = vmatprep.subr.mxu0 0.0
  %1446 = vmatpush1.msra.mxu0 %v1423
  %1447 = vmatprep.subr.mxu0 0.0
  %1448 = vmatpush1.msra.mxu0 %v1424
  %1449 = vmatprep.subr.mxu0 0.0
  %1450 = vmatpush1.msra.mxu0 %v1425
  %1451 = vmatprep.subr.mxu0 0.0
  %1452 = vmatpush1.msra.mxu0 %v1426
  %1453 = vmatprep.subr.mxu0 0.0
  %1454 = vmatpush1.msra.mxu0 %v1427
  %1455 = vmatprep.subr.mxu0 0.0
  %1456 = vmatpush1.msra.mxu0 %v1428
  %1457 = vmatprep.subr.mxu0 0.0
  %1458 = vmatpush1.msra.mxu0 %v1429
  %1459 = vmatprep.subr.mxu0 0.0
  %1460 = vmatpush1.msra.mxu0 %v1430
  %1461 = vmatprep.subr.mxu0 0.0
  %1462 = vmatpush1.msra.mxu0 %v1431
  %1463 = vmatprep.subr.mxu0 0.0
  %1464 = vmatpush1.msra.mxu0 %v1432
  %1465 = vmatprep.subr.mxu0 0.0
  %1466 = vmatpush1.msra.mxu0 %v1433
  %1467 = vmatprep.subr.mxu0 0.0
  %1468 = vmatpush1.msra.mxu0 %v1434
  %1469 = vmatprep.subr.mxu0 0.0
  %1470 = vmatpush1.msra.mxu0 0.0
  %1471 = vmatprep.subr.mxu0 0.0
  %1472 = vmatpush1.msra.mxu0 0.0
  %1473 = vmatprep.subr.mxu0 0.0
  %1474 = vmatpush1.msra.mxu0 0.0
  %1475 = vmatprep.subr.mxu0 0.0
  %1476 = vmatpush1.msra.mxu0 0.0
  %1477 = vmatprep.subr.mxu0 0.0
  %1478 = vmatpush1.msra.mxu0 0.0
  %1479 = vmatprep.subr.mxu0 0.0
  %1480 = vmatpush1.msra.mxu0 0.0
  %1481 = vmatprep.subr.mxu0 0.0
  %1482 = vmatpush1.msra.mxu0 0.0
  %1483 = vmatprep.subr.mxu0 0.0
  %1484 = vmatpush1.msra.mxu0 0.0
  %1485 = vmatprep.subr.mxu0 0.0
  %1486 = vmatpush1.msra.mxu0 0.0
  %1487 = vmatprep.subr.mxu0 0.0
  %1488 = vmatpush1.msra.mxu0 0.0
  %1489 = vmatprep.subr.mxu0 0.0
  %1490 = vmatpush1.msra.mxu0 0.0
  %1491 = vmatprep.subr.mxu0 0.0
  %1492 = vmatpush1.msra.mxu0 0.0
  %1493 = vmatprep.subr.mxu0 0.0
  %1494 = vmatpush1.msra.mxu0 0.0
  %1495 = vmatprep.subr.mxu0 0.0
  %1496 = vmatpush1.msra.mxu0 0.0
  %1497 = vmatprep.subr.mxu0 0.0
  %1498 = vmatpush1.msra.mxu0 0.0
  %1499 = vmatprep.subr.mxu0 0.0
  %1500 = vmatpush1.msra.mxu0 0.0
  %1501 = vmatprep.mubr.f32.mxu0 0.0
  %1502 = vmatmul.mubr.f32.gmra.mrb[0].mxu0 %v1416
  %v1503 = vpop.f32.mrb[0].mxu0
  %v1504 = vadd.f32 %v1436, %v1503
  %v1505 = vpop.f32.mrb[0].mxu0
  %1506 = vdwg.mxu0
  %1507 = vst [vmem:[%s9] sm:$0x1] %v1504
  // Predicated region
  $region38: #{critic_forward.1} parent=0 // pred_check
    _
  $region39: #{critic_forward.1} parent=0 // pred_check_branch
    %1509 = sbr.rel (0) target = $region41
  $region40: #{critic_forward.1} parent=0 // pred_region
    _
  $region41: #{critic_forward.1} parent=0 // pred_fallthru
    _
  // Predicated region
  $region42: #{critic_forward.1} parent=0 // pred_check
    _
  $region43: #{critic_forward.1} parent=0 // pred_check_branch
    %1511 = sbr.rel (0) target = $region45
  $region44: #{critic_forward.1} parent=0 // pred_region
    _
  $region45: #{critic_forward.1} parent=0 // pred_fallthru
    _

</llo_original>
